<compile_context>
chip_gen: v6e
topology: v6e:2x2x1
jax: 0.10.0
libtpu: 0.0.40
codegen_flags: <defaults>
</compile_context>

<pallas_src>
import functools

import jax
import jax.numpy as jnp
from jax import lax
from jax.experimental import pallas as pl
from jax.experimental.pallas import tpu as pltpu

EPS = 1e-5


def _round_up(x, m):
    return (x + m - 1) // m * m


def _pick_row_tile(OH, OW):
    """Largest divisor of OH with <= ~1024 output pixels per tile and a sublane-aligned
    flattened tile (RT*OW % 8 == 0).  Divisibility of OH guarantees the in-kernel row
    window never reads past the padded image."""
    best = OH  # fallback: whole height (block equals full dim -> always legal)
    for rt in range(1, OH + 1):
        if OH % rt == 0 and rt * OW <= 1024 and (rt * OW) % 8 == 0:
            best = rt
    return best


# ---------------------------------------------------------------------------
# Kernel 1: conv as a single folded-tap matmul per (image, output-row tile)
#           + fused per-tile BN partial stats (sum / sumsq) epilogue
# ---------------------------------------------------------------------------
def _conv_stats_kernel(x_ref, w_ref, y_ref, stat_ref, *,
                       KH, KW, RT, OW, stride, dilation):
    """One grid step = (image n, output-row tile r).

    x_ref    : (1, Hp, Wp, Cinp)     bf16  whole padded image (resident across r)
    w_ref    : (KH*KW*Cinp, Coutp)   bf16  folded weight slab (resident)
    y_ref    : (1, RT*OW, Coutp)     bf16  conv output tile (lane-dense channels)
    stat_ref : (1, 1, 2, Coutp)      f32   per-tile [sum; sumsq] over the tile's pixels
    """
    r = pl.program_id(1)
    row0 = pl.multiple_of(r * (RT * stride), RT * stride)

    # In-VMEM im2col slab: KH*KW shifted slices concatenated along the channel/lane axis
    # -> one MXU matmul with contraction depth KH*KW*Cinp (instead of KH*KW shallow
    # matmuls + full-accumulator read-modify-writes).
    slabs = []
    for i in range(KH):
        for j in range(KW):
            if stride == 1:
                a = x_ref[0, pl.ds(row0 + i * dilation, RT),
                          pl.ds(j * dilation, OW), :]
            else:
                # TODO(synk): for stride>1, pre-splitting x into stride^2 dense phases in
                # the wrapper would avoid the strided sublane read; kept simple here.
                a = x_ref[0, pl.ds(row0 + i * dilation, RT, stride),
                          pl.ds(j * dilation, OW, stride), :]
            slabs.append(a.reshape(RT * OW, a.shape[-1]))
    patch = slabs[0] if len(slabs) == 1 else jnp.concatenate(slabs, axis=-1)

    acc = jnp.dot(patch, w_ref[...], preferred_element_type=jnp.float32)  # (RT*OW, Coutp)

    y_ref[0, :, :] = acc.astype(y_ref.dtype)

    # BN partial stats in f32 (pre-bf16-rounding), two direct row stores — no concat.
    stat_ref[0, 0, pl.ds(0, 1), :] = jnp.sum(acc, axis=0, keepdims=True)
    stat_ref[0, 0, pl.ds(1, 1), :] = jnp.sum(acc * acc, axis=0, keepdims=True)


def conv2d_with_stats(x_pad, w_flat, OH, OW, KH, KW, stride, dilation, RT):
    N, Hp, Wp, Cinp = x_pad.shape
    KKC, Coutp = w_flat.shape
    R = OH // RT

    kernel = functools.partial(_conv_stats_kernel, KH=KH, KW=KW, RT=RT, OW=OW,
                               stride=stride, dilation=dilation)

    flops = 2 * N * OH * OW * KH * KW * Cinp * Coutp
    bytes_accessed = (x_pad.size * 2 + w_flat.size * 2
                      + N * OH * OW * Coutp * 2 + N * R * 2 * Coutp * 4)

    # VMEM budget: double-buffered x/y blocks + resident weights + im2col slab + f32 acc.
    # Cap well inside v7x's 64 MiB physical VMEM; floor at 16 MiB (v5e default scoped).
    x_blk = Hp * Wp * Cinp * 2
    y_blk = RT * OW * Coutp * 2
    w_blk = KKC * Coutp * 2
    slab = RT * OW * KKC * 2 + RT * OW * Coutp * 4
    need = 2 * x_blk + 2 * y_blk + w_blk + slab + 4 * 2 * Coutp * 4
    vmem_limit = int(min(48 * 2**20, max(16 * 2**20, 2 * need)))

    return pl.pallas_call(
        kernel,
        out_shape=(jax.ShapeDtypeStruct((N, OH * OW, Coutp), jnp.bfloat16),
                   jax.ShapeDtypeStruct((N, R, 2, Coutp), jnp.float32)),
        grid_spec=pltpu.PrefetchScalarGridSpec(
            num_scalar_prefetch=0,
            grid=(N, R),
            in_specs=[
                # Whole padded bf16 image, resident across the row-tile axis (only
                # re-DMA'd when n changes).
                # TODO(synk): for stem-sized images switch to a halo'd row-window
                # BlockSpec so x VMEM is bounded by the tile, not the image.
                pl.BlockSpec((1, Hp, Wp, Cinp), lambda n, r: (n, 0, 0, 0)),
                pl.BlockSpec((KKC, Coutp), lambda n, r: (0, 0)),
            ],
            out_specs=[
                pl.BlockSpec((1, RT * OW, Coutp), lambda n, r: (n, r, 0)),
                pl.BlockSpec((1, 1, 2, Coutp), lambda n, r: (n, r, 0, 0)),
            ],
        ),
        compiler_params=pltpu.CompilerParams(
            dimension_semantics=("parallel", "parallel"),
            vmem_limit_bytes=vmem_limit,
        ),
        cost_estimate=pl.CostEstimate(flops=flops, transcendentals=0,
                                      bytes_accessed=bytes_accessed),
    )(x_pad, w_flat)


# ---------------------------------------------------------------------------
# Kernel 2: tiled fused BN-apply (scale*y + shift) + ReLU  (bf16 in, f32 out)
# ---------------------------------------------------------------------------
def _scale_shift_relu_kernel(y_ref, scale_ref, shift_ref, o_ref):
    y = y_ref[...].astype(jnp.float32)
    o_ref[...] = jnp.maximum(y * scale_ref[...] + shift_ref[...], 0.0)


def scale_shift_relu(y2d, scale, shift, tm=1024):
    M, Coutp = y2d.shape
    tm = min(tm, _round_up(M, 8))          # sublane-aligned tile; partial last tile masked
    grid = (pl.cdiv(M, tm),)
    # Double-buffered bf16-in + f32-out tiles; keep inside v7x's default scoped VMEM.
    vmem_limit = int(min(48 * 2**20, max(16 * 2**20, 4 * tm * Coutp * (2 + 4))))
    return pl.pallas_call(
        _scale_shift_relu_kernel,
        out_shape=jax.ShapeDtypeStruct((M, Coutp), jnp.float32),
        grid_spec=pltpu.PrefetchScalarGridSpec(
            num_scalar_prefetch=0,
            grid=grid,
            in_specs=[
                pl.BlockSpec((tm, Coutp), lambda i: (i, 0)),
                pl.BlockSpec((1, Coutp), lambda i: (0, 0)),
                pl.BlockSpec((1, Coutp), lambda i: (0, 0)),
            ],
            out_specs=pl.BlockSpec((tm, Coutp), lambda i: (i, 0)),
        ),
        compiler_params=pltpu.CompilerParams(
            dimension_semantics=("parallel",),
            vmem_limit_bytes=vmem_limit,
        ),
    )(y2d, scale, shift)


# ---------------------------------------------------------------------------
# Wrapper: BasicConv.forward semantics (NCHW in / NCHW out, like the PyTorch module)
# ---------------------------------------------------------------------------
def basic_conv_forward(x_nchw, weight_oihw, gamma, beta,
                       stride=1, padding=0, dilation=1):
    N, Cin, H, W = x_nchw.shape
    Cout, _, KH, KW = weight_oihw.shape
    OH = (H + 2 * padding - dilation * (KH - 1) - 1) // stride + 1
    OW = (W + 2 * padding - dilation * (KW - 1) - 1) // stride + 1

    Cinp = _round_up(Cin, 16)       # bf16 packs sublanes in pairs -> 16-deep contraction tiles
    Coutp = _round_up(Cout, 128)    # lane-dense output channels
    RT = _pick_row_tile(OH, OW)

    # NCHW -> NHWC, zero-pad spatially + channels, cast MXU operands to bf16.
    # TODO(synk): in an NHWC end-to-end pipeline these layout passes disappear.
    x = jnp.transpose(x_nchw, (0, 2, 3, 1)).astype(jnp.float32)
    x = jnp.pad(x, ((0, 0), (padding, padding), (padding, padding), (0, Cinp - Cin)))
    x = x.astype(jnp.bfloat16)

    # OIHW -> folded (KH*KW*Cinp, Coutp) bf16 weight slab; column order matches the
    # in-kernel tap-concat order (i over KH, j over KW, then channels).
    w = jnp.transpose(weight_oihw, (2, 3, 1, 0)).astype(jnp.float32)   # (KH, KW, Cin, Cout)
    w = jnp.pad(w, ((0, 0), (0, 0), (0, Cinp - Cin), (0, Coutp - Cout)))
    w = w.reshape(KH * KW * Cinp, Coutp).astype(jnp.bfloat16)

    y, stats = conv2d_with_stats(x, w, OH, OW, KH, KW, stride, dilation, RT)

    # BN training-mode batch statistics over N*OH*OW (biased variance = PyTorch BN fwd).
    # Heavy per-pixel reductions were fused into the conv epilogue; this is O(Cout) math.
    cnt = float(N * OH * OW)
    total = jnp.sum(stats, axis=(0, 1))            # (2, Coutp)
    mean = total[0] / cnt
    var = total[1] / cnt - mean * mean
    gamma_p = jnp.pad(gamma.astype(jnp.float32), (0, Coutp - Cout))
    beta_p = jnp.pad(beta.astype(jnp.float32), (0, Coutp - Cout))
    scale = gamma_p * lax.rsqrt(var + EPS)
    shift = beta_p - mean * scale
    # TODO(synk): running_mean/running_var momentum (0.01) buffer updates are not produced;
    # only the forward activation is computed, matching the module's output.

    out = scale_shift_relu(y.reshape(N * OH * OW, Coutp),
                           scale.reshape(1, Coutp), shift.reshape(1, Coutp))
    out = out.reshape(N, OH, OW, Coutp)[..., :Cout]
    # Final NHWC -> NCHW only to match the PyTorch interface.
    return jnp.transpose(out, (0, 3, 1, 2))


# ---------------------------------------------------------------------------
# Reference (plain JAX) — mirrors the kernel's rounding: bf16 conv operands, f32 conv &
# stats, bf16-rounded intermediate y for the normalization.
# ---------------------------------------------------------------------------
def _reference(x_nchw, weight_oihw, gamma, beta, stride, padding, dilation):
    x = jnp.transpose(x_nchw, (0, 2, 3, 1)).astype(jnp.bfloat16).astype(jnp.float32)
    w = jnp.transpose(weight_oihw, (2, 3, 1, 0)).astype(jnp.bfloat16).astype(jnp.float32)
    y = lax.conv_general_dilated(
        x, w, window_strides=(stride, stride),
        padding=[(padding, padding), (padding, padding)],
        rhs_dilation=(dilation, dilation),
        dimension_numbers=("NHWC", "HWIO", "NHWC"),
    )
    mean = jnp.mean(y, axis=(0, 1, 2), keepdims=True)
    var = jnp.mean((y - mean) ** 2, axis=(0, 1, 2), keepdims=True)
    y_q = y.astype(jnp.bfloat16).astype(jnp.float32)        # bf16 intermediate, like kernel
    o = jnp.maximum((y_q - mean) * lax.rsqrt(var + EPS) * gamma + beta, 0.0)
    return jnp.transpose(o, (0, 3, 1, 2))


if __name__ == "__main__":
    # BasicConv(in_planes=4, out_planes=8, kernel_size=3, stride=1, padding=1)
    N, Cin, H, W = 2, 4, 16, 16
    Cout, K = 8, 3
    stride, padding, dilation = 1, 1, 1

    key = jax.random.PRNGKey(0)
    k_x, k_w, k_g, k_b = jax.random.split(key, 4)
    x = jax.random.normal(k_x, (N, Cin, H, W), dtype=jnp.float32)
    weight = 0.1 * jax.random.normal(k_w, (Cout, Cin, K, K), dtype=jnp.float32)   # OIHW
    gamma = 1.0 + 0.1 * jax.random.normal(k_g, (Cout,), dtype=jnp.float32)        # BN weight
    beta = 0.1 * jax.random.normal(k_b, (Cout,), dtype=jnp.float32)               # BN bias

    out = basic_conv_forward(x, weight, gamma, beta, stride, padding, dilation)
    out = jax.block_until_ready(out)

    ref = _reference(x, weight, gamma, beta, stride, padding, dilation)
    assert out.shape == (N, Cout, H, W)
    err = float(jnp.max(jnp.abs(out - ref)))
    assert jnp.allclose(out, ref, atol=3e-3, rtol=3e-3), err

    print("KERNEL_OK")
</pallas_src>

<mosaic_0001>
module attributes {stable_mosaic.version = 11 : i64} {
  func.func @_conv_stats_kernel(%arg0: i32, %arg1: i32, %arg2: memref<1x18x18x16xbf16, #tpu.memory_space<vmem>>, %arg3: memref<144x128xbf16, #tpu.memory_space<vmem>>, %arg4: memref<1x256x128xbf16, #tpu.memory_space<vmem>>, %arg5: memref<1x1x2x128xf32, #tpu.memory_space<vmem>>) attributes {dimension_semantics = [#tpu.dimension_semantics<parallel>, #tpu.dimension_semantics<parallel>], iteration_bounds = array<i64: 2, 1>, scalar_prefetch = 0 : i64, scratch_operands = 0 : i64, tpu.core_type = #tpu.core_type<tc>, window_params = [{transform_indices = @transform_0, window_bounds = array<i64: 1, 18, 18, 16>}, {pipeline_mode = #tpu.pipeline_mode<synchronous>, transform_indices = @transform_1, window_bounds = array<i64: 144, 128>}, {transform_indices = @transform_2, window_bounds = array<i64: 1, 256, 128>}, {transform_indices = @transform_3, window_bounds = array<i64: 1, 1, 2, 128>}]} {
    %c16_i32 = arith.constant 16 : i32
    %0 = arith.muli %arg1, %c16_i32 : i32
    %1 = tpu.assume_multiple %0, 16 : i32
    %c0_i32 = arith.constant 0 : i32
    %2 = arith.addi %1, %c0_i32 : i32
    %c0 = arith.constant 0 : index
    %3 = arith.index_cast %2 : i32 to index
    %c0_0 = arith.constant 0 : index
    %c0_1 = arith.constant 0 : index
    %4 = vector.load %arg2[%c0, %3, %c0_0, %c0_1] : memref<1x18x18x16xbf16, #tpu.memory_space<vmem>>, vector<1x16x16x16xbf16>
    %5 = vector.shape_cast %4 : vector<1x16x16x16xbf16> to vector<16x16x16xbf16>
    %6 = vector.shape_cast %5 : vector<16x16x16xbf16> to vector<256x16xbf16>
    %c0_i32_2 = arith.constant 0 : i32
    %7 = arith.addi %1, %c0_i32_2 : i32
    %c0_3 = arith.constant 0 : index
    %8 = arith.index_cast %7 : i32 to index
    %c1 = arith.constant 1 : index
    %c0_4 = arith.constant 0 : index
    %9 = vector.load %arg2[%c0_3, %8, %c1, %c0_4] : memref<1x18x18x16xbf16, #tpu.memory_space<vmem>>, vector<1x16x16x16xbf16>
    %10 = vector.shape_cast %9 : vector<1x16x16x16xbf16> to vector<16x16x16xbf16>
    %11 = vector.shape_cast %10 : vector<16x16x16xbf16> to vector<256x16xbf16>
    %c0_i32_5 = arith.constant 0 : i32
    %12 = arith.addi %1, %c0_i32_5 : i32
    %c0_6 = arith.constant 0 : index
    %13 = arith.index_cast %12 : i32 to index
    %c2 = arith.constant 2 : index
    %c0_7 = arith.constant 0 : index
    %14 = vector.load %arg2[%c0_6, %13, %c2, %c0_7] : memref<1x18x18x16xbf16, #tpu.memory_space<vmem>>, vector<1x16x16x16xbf16>
    %15 = vector.shape_cast %14 : vector<1x16x16x16xbf16> to vector<16x16x16xbf16>
    %16 = vector.shape_cast %15 : vector<16x16x16xbf16> to vector<256x16xbf16>
    %c1_i32 = arith.constant 1 : i32
    %17 = arith.addi %1, %c1_i32 : i32
    %c0_8 = arith.constant 0 : index
    %18 = arith.index_cast %17 : i32 to index
    %c0_9 = arith.constant 0 : index
    %c0_10 = arith.constant 0 : index
    %19 = vector.load %arg2[%c0_8, %18, %c0_9, %c0_10] : memref<1x18x18x16xbf16, #tpu.memory_space<vmem>>, vector<1x16x16x16xbf16>
    %20 = vector.shape_cast %19 : vector<1x16x16x16xbf16> to vector<16x16x16xbf16>
    %21 = vector.shape_cast %20 : vector<16x16x16xbf16> to vector<256x16xbf16>
    %c1_i32_11 = arith.constant 1 : i32
    %22 = arith.addi %1, %c1_i32_11 : i32
    %c0_12 = arith.constant 0 : index
    %23 = arith.index_cast %22 : i32 to index
    %c1_13 = arith.constant 1 : index
    %c0_14 = arith.constant 0 : index
    %24 = vector.load %arg2[%c0_12, %23, %c1_13, %c0_14] : memref<1x18x18x16xbf16, #tpu.memory_space<vmem>>, vector<1x16x16x16xbf16>
    %25 = vector.shape_cast %24 : vector<1x16x16x16xbf16> to vector<16x16x16xbf16>
    %26 = vector.shape_cast %25 : vector<16x16x16xbf16> to vector<256x16xbf16>
    %c1_i32_15 = arith.constant 1 : i32
    %27 = arith.addi %1, %c1_i32_15 : i32
    %c0_16 = arith.constant 0 : index
    %28 = arith.index_cast %27 : i32 to index
    %c2_17 = arith.constant 2 : index
    %c0_18 = arith.constant 0 : index
    %29 = vector.load %arg2[%c0_16, %28, %c2_17, %c0_18] : memref<1x18x18x16xbf16, #tpu.memory_space<vmem>>, vector<1x16x16x16xbf16>
    %30 = vector.shape_cast %29 : vector<1x16x16x16xbf16> to vector<16x16x16xbf16>
    %31 = vector.shape_cast %30 : vector<16x16x16xbf16> to vector<256x16xbf16>
    %c2_i32 = arith.constant 2 : i32
    %32 = arith.addi %1, %c2_i32 : i32
    %c0_19 = arith.constant 0 : index
    %33 = arith.index_cast %32 : i32 to index
    %c0_20 = arith.constant 0 : index
    %c0_21 = arith.constant 0 : index
    %34 = vector.load %arg2[%c0_19, %33, %c0_20, %c0_21] : memref<1x18x18x16xbf16, #tpu.memory_space<vmem>>, vector<1x16x16x16xbf16>
    %35 = vector.shape_cast %34 : vector<1x16x16x16xbf16> to vector<16x16x16xbf16>
    %36 = vector.shape_cast %35 : vector<16x16x16xbf16> to vector<256x16xbf16>
    %c2_i32_22 = arith.constant 2 : i32
    %37 = arith.addi %1, %c2_i32_22 : i32
    %c0_23 = arith.constant 0 : index
    %38 = arith.index_cast %37 : i32 to index
    %c1_24 = arith.constant 1 : index
    %c0_25 = arith.constant 0 : index
    %39 = vector.load %arg2[%c0_23, %38, %c1_24, %c0_25] : memref<1x18x18x16xbf16, #tpu.memory_space<vmem>>, vector<1x16x16x16xbf16>
    %40 = vector.shape_cast %39 : vector<1x16x16x16xbf16> to vector<16x16x16xbf16>
    %41 = vector.shape_cast %40 : vector<16x16x16xbf16> to vector<256x16xbf16>
    %c2_i32_26 = arith.constant 2 : i32
    %42 = arith.addi %1, %c2_i32_26 : i32
    %c0_27 = arith.constant 0 : index
    %43 = arith.index_cast %42 : i32 to index
    %c2_28 = arith.constant 2 : index
    %c0_29 = arith.constant 0 : index
    %44 = vector.load %arg2[%c0_27, %43, %c2_28, %c0_29] : memref<1x18x18x16xbf16, #tpu.memory_space<vmem>>, vector<1x16x16x16xbf16>
    %45 = vector.shape_cast %44 : vector<1x16x16x16xbf16> to vector<16x16x16xbf16>
    %46 = vector.shape_cast %45 : vector<16x16x16xbf16> to vector<256x16xbf16>
    %47 = tpu.concatenate %6, %11, %16, %21, %26, %31, %36, %41, %46 in 1 : vector<256x16xbf16>, vector<256x16xbf16>, vector<256x16xbf16>, vector<256x16xbf16>, vector<256x16xbf16>, vector<256x16xbf16>, vector<256x16xbf16>, vector<256x16xbf16>, vector<256x16xbf16> -> vector<256x144xbf16>
    %c0_30 = arith.constant 0 : index
    %c0_31 = arith.constant 0 : index
    %48 = vector.load %arg3[%c0_30, %c0_31] : memref<144x128xbf16, #tpu.memory_space<vmem>>, vector<144x128xbf16>
    %cst = arith.constant dense<0.000000e+00> : vector<256x128xf32>
    %49 = tpu.matmul %47, %48, %cst {dimension_numbers = #tpu.dot_dimension_numbers<[1], [0], [0], [1], [0, 0, 1, 1], [], []>} : vector<256x144xbf16>, vector<144x128xbf16>, vector<256x128xf32> -> vector<256x128xf32>
    %50 = arith.truncf %49 : vector<256x128xf32> to vector<256x128xbf16>
    %c0_32 = arith.constant 0 : index
    %c0_33 = arith.constant 0 : index
    %c0_34 = arith.constant 0 : index
    %51 = vector.load %arg4[%c0_32, %c0_33, %c0_34] : memref<1x256x128xbf16, #tpu.memory_space<vmem>>, vector<1x256x128xbf16>
    %52 = vector.shape_cast %51 : vector<1x256x128xbf16> to vector<256x128xbf16>
    %53 = vector.shape_cast %50 : vector<256x128xbf16> to vector<1x256x128xbf16>
    tpu.vector_store %arg4[%c0_32, %c0_33, %c0_34], %53 {strides = array<i32>} : memref<1x256x128xbf16, #tpu.memory_space<vmem>>, vector<1x256x128xbf16>,
    %cst_35 = arith.constant dense<0.000000e+00> : vector<128xf32>
    %54 = vector.multi_reduction <add>, %49, %cst_35 [0] : vector<256x128xf32> to vector<128xf32>
    %55 = vector.shape_cast %54 : vector<128xf32> to vector<1x128xf32>
    %c0_36 = arith.constant 0 : index
    %c0_37 = arith.constant 0 : index
    %c0_38 = arith.constant 0 : index
    %c0_39 = arith.constant 0 : index
    %56 = vector.load %arg5[%c0_36, %c0_37, %c0_38, %c0_39] : memref<1x1x2x128xf32, #tpu.memory_space<vmem>>, vector<1x1x1x128xf32>
    %57 = vector.shape_cast %56 : vector<1x1x1x128xf32> to vector<1x128xf32>
    %58 = vector.shape_cast %55 : vector<1x128xf32> to vector<1x1x1x128xf32>
    tpu.vector_store %arg5[%c0_36, %c0_37, %c0_38, %c0_39], %58 {strides = array<i32>} : memref<1x1x2x128xf32, #tpu.memory_space<vmem>>, vector<1x1x1x128xf32>,
    %59 = arith.mulf %49, %49 : vector<256x128xf32>
    %cst_40 = arith.constant dense<0.000000e+00> : vector<128xf32>
    %60 = vector.multi_reduction <add>, %59, %cst_40 [0] : vector<256x128xf32> to vector<128xf32>
    %61 = vector.shape_cast %60 : vector<128xf32> to vector<1x128xf32>
    %c0_41 = arith.constant 0 : index
    %c0_42 = arith.constant 0 : index
    %c1_43 = arith.constant 1 : index
    %c0_44 = arith.constant 0 : index
    %62 = vector.load %arg5[%c0_41, %c0_42, %c1_43, %c0_44] : memref<1x1x2x128xf32, #tpu.memory_space<vmem>>, vector<1x1x1x128xf32>
    %63 = vector.shape_cast %62 : vector<1x1x1x128xf32> to vector<1x128xf32>
    %64 = vector.shape_cast %61 : vector<1x128xf32> to vector<1x1x1x128xf32>
    tpu.vector_store %arg5[%c0_41, %c0_42, %c1_43, %c0_44], %64 {strides = array<i32>} : memref<1x1x2x128xf32, #tpu.memory_space<vmem>>, vector<1x1x1x128xf32>,
    return
  }
  func.func @transform_0(%arg0: i32, %arg1: i32) -> (i32, i32, i32, i32) {
    %c0_i32 = arith.constant 0 : i32
    %c0_i32_0 = arith.constant 0 : i32
    %c0_i32_1 = arith.constant 0 : i32
    %c0_i32_2 = arith.constant 0 : i32
    return %arg0, %c0_i32, %c0_i32_0, %c0_i32_1 : i32, i32, i32, i32
  }
  func.func @transform_1(%arg0: i32, %arg1: i32) -> (i32, i32) {
    %c0_i32 = arith.constant 0 : i32
    %c0_i32_0 = arith.constant 0 : i32
    %c0_i32_1 = arith.constant 0 : i32
    return %c0_i32, %c0_i32_0 : i32, i32
  }
  func.func @transform_2(%arg0: i32, %arg1: i32) -> (i32, i32, i32) {
    %c0_i32 = arith.constant 0 : i32
    %c0_i32_0 = arith.constant 0 : i32
    return %arg0, %arg1, %c0_i32 : i32, i32, i32
  }
  func.func @transform_3(%arg0: i32, %arg1: i32) -> (i32, i32, i32, i32) {
    %c0_i32 = arith.constant 0 : i32
    %c0_i32_0 = arith.constant 0 : i32
    %c0_i32_1 = arith.constant 0 : i32
    return %arg0, %arg1, %c0_i32, %c0_i32_0 : i32, i32, i32, i32
  }
}

</mosaic_0001>

<llo_original>
// kernel: tpu_custom_call.1
$region0: #{tpu_custom_call.1}
  #allocation0 [shape = 'u32[]', space=smem, size = 0x4, offset = 0x4, fixed_abs, tag = 'smem constant byte address 0x4 - core index']
  #allocation1 [shape = 'u32[144,128]{1,0:T(1,128)}', space=vmem, size = 0x12000, scoped, tag = 'internal scratch']
  %s0 = inlined_call_operand.vmem [shape: bf16[2,18,18,16], index: 0, kind: input, shape index: {}]
  %s1 = inlined_call_operand.vmem [shape: bf16[144,128], index: 1, kind: input, shape index: {}]
  %s2 = inlined_call_operand.hbm [shape: bf16[2,256,128], index: 2, kind: output, shape index: {0}]
  %s3 = inlined_call_operand.hbm [shape: f32[2,1,2,128], index: 3, kind: output, shape index: {1}]
  %4 = xla_tuple %s2, %s3
  %s5 = sld [smem:[#allocation0]]
  $region49: #{tpu_custom_call.1} parent=0
    _
  %s7 = ssub.s32 1, %s5
  %s8 = scalar_select 0, %s7, %s5
  $region1: #{tpu_custom_call.1} parent=0
    #allocation2 [shape = 'u8[131072]{0}', space=vmem, size = 0x20000, scoped, tag = 'output window, operand 0']
    #allocation3 [shape = 's32[2]{0}', space=sflag, size = 0x8, scoped, tag = 'scoped memory for tpu_custom_call.1']
    #allocation4 [shape = 'u8[2048]{0}', space=vmem, size = 0x800, scoped, tag = 'output window, operand 1']
    #allocation5 [shape = 's32[2]{0}', space=sflag, size = 0x8, scoped, tag = 'scoped memory for tpu_custom_call.1']
    %9 = vsyncpa [#allocation3], 0
    %s10 = scalar_lea.sflag [#allocation3], 1
    %11 = vsyncpa %s10, 0
    %12 = vsyncpa [#allocation5], 0
    %s13 = scalar_lea.sflag [#allocation5], 1
    %14 = vsyncpa %s13, 0
    loop: start=0, step=1, limit=4
    $region2: #{tpu_custom_call.1} parent=1 // loop_pre_header
      _
    $region3: #{tpu_custom_call.1} parent=1 // loop_header
      %s16 = sphi 0, %s20
      %p17 = scmp.ge.s32.totalorder %s16, 4
      %s23 = sphi 0, %s35
      %s24 = sphi 0, %s31
      %s25 = sphi 0, %s23
      %s26 = sphi 0, %s24
      %s27 = sphi 0, %s25
      %s28 = sphi 0, %s26
      %s38 = sphi 0, %s40
      %s41 = sphi 0, %s38
      %s42 = sphi 0, %s41
      %s58 = sphi 0, %s42
      %s62 = sphi 0, %s62
      %s64 = sphi 0, %s62
      %s65 = sphi 0, %s64
      %s79 = sphi 0, %s65
      %s87 = sphi 0, %s89
      %s90 = sphi 0, %s87
      %s91 = sphi 0, %s90
      %s107 = sphi 0, %s91
      %s115 = sphi 0, %s117
      %s118 = sphi 0, %s115
      %s119 = sphi 0, %s118
      %s135 = sphi 0, %s119
    $region4: #{tpu_custom_call.1} parent=1 // loop_header_branch
      %19 = sbr.rel (%p17) target = $region8
    $region5: #{tpu_custom_call.1} parent=1 // loop_body
      %s21 = ssub.s32 %s16, 1
      %s22 = ssub.s32 %s16, 2
      %s29 = sadd.s32 1, %s24
      %p30 = scmp.ge.s32.totalorder %s29, 1
      %s31 = scalar_select %p30, 0, %s29
      %s32 = sadd.s32 1, %s23
      %s33 = scalar_select %p30, %s32, %s23
      %p34 = scmp.ge.s32.totalorder %s33, 2
      %s35 = scalar_select %p34, 0, %s33
      %s36 = ssub.s32 %s23, %s35
      %p37 = scmp.eq.s32.totalorder %s36, 0
      %s39 = sadd.s32 %s38, 1
      %s40 = scalar_select %p37, %s38, %s39
      %p43 = pneg %p37
      %p44 = scmp.eq.s32.totalorder %s16, 1
      %p45 = por %p43, %p44
      %p46 = scmp.ne.s32.totalorder %s38, %s41
      %p47 = scmp.eq.s32.totalorder %s16, 0
      %p48 = por %p46, %p47
      %p49 = scmp.ne.s32.totalorder %s38, %s41
      %p50 = scmp.eq.s32.totalorder %s21, 1
      %p51 = por %p49, %p50
      %p52 = scmp.ne.s32.totalorder %s41, %s42
      %p53 = scmp.eq.s32.totalorder %s21, 0
      %p54 = por %p52, %p53
      %p55 = scmp.ne.s32.totalorder %s41, %s42
      %p56 = scmp.eq.s32.totalorder %s22, 1
      %p57 = por %p55, %p56
      %p59 = scmp.ne.s32.totalorder %s42, %s58
      %p60 = scmp.eq.s32.totalorder %s22, 0
      %p61 = por %p59, %p60
      %s63 = sadd.s32 %s62, 1
      %p66 = scmp.eq.s32.totalorder %s16, 1
      %p67 = scmp.ne.s32.totalorder %s62, %s64
      %p68 = scmp.eq.s32.totalorder %s16, 0
      %p69 = por %p67, %p68
      %p70 = scmp.ne.s32.totalorder %s62, %s64
      %p71 = scmp.eq.s32.totalorder %s21, 1
      %p72 = por %p70, %p71
      %p73 = scmp.ne.s32.totalorder %s64, %s65
      %p74 = scmp.eq.s32.totalorder %s21, 0
      %p75 = por %p73, %p74
      %p76 = scmp.ne.s32.totalorder %s64, %s65
      %p77 = scmp.eq.s32.totalorder %s22, 1
      %p78 = por %p76, %p77
      %p80 = scmp.ne.s32.totalorder %s65, %s79
      %p81 = scmp.eq.s32.totalorder %s22, 0
      %p82 = por %p80, %p81
      %s83 = ssub.s32 %s23, %s35
      %s84 = ssub.s32 %s24, %s31
      %s85 = sor.u32 %s83, %s84
      %p86 = scmp.eq.s32.totalorder %s85, 0
      %s88 = sadd.s32 %s87, 1
      %s89 = scalar_select %p86, %s87, %s88
      %p92 = pneg %p86
      %p93 = scmp.eq.s32.totalorder %s16, 1
      %p94 = por %p92, %p93
      %p95 = scmp.ne.s32.totalorder %s87, %s90
      %p96 = scmp.eq.s32.totalorder %s16, 0
      %p97 = por %p95, %p96
      %p98 = scmp.ne.s32.totalorder %s87, %s90
      %p99 = scmp.eq.s32.totalorder %s21, 1
      %p100 = por %p98, %p99
      %p101 = scmp.ne.s32.totalorder %s90, %s91
      %p102 = scmp.eq.s32.totalorder %s21, 0
      %p103 = por %p101, %p102
      %p104 = scmp.ne.s32.totalorder %s90, %s91
      %p105 = scmp.eq.s32.totalorder %s22, 1
      %p106 = por %p104, %p105
      %p108 = scmp.ne.s32.totalorder %s91, %s107
      %p109 = scmp.eq.s32.totalorder %s22, 0
      %p110 = por %p108, %p109
      %s111 = ssub.s32 %s23, %s35
      %s112 = ssub.s32 %s24, %s31
      %s113 = sor.u32 %s111, %s112
      %p114 = scmp.eq.s32.totalorder %s113, 0
      %s116 = sadd.s32 %s115, 1
      %s117 = scalar_select %p114, %s115, %s116
      %p120 = pneg %p114
      %p121 = scmp.eq.s32.totalorder %s16, 1
      %p122 = por %p120, %p121
      %p123 = scmp.ne.s32.totalorder %s115, %s118
      %p124 = scmp.eq.s32.totalorder %s16, 0
      %p125 = por %p123, %p124
      %p126 = scmp.ne.s32.totalorder %s115, %s118
      %p127 = scmp.eq.s32.totalorder %s21, 1
      %p128 = por %p126, %p127
      %p129 = scmp.ne.s32.totalorder %s118, %s119
      %p130 = scmp.eq.s32.totalorder %s21, 0
      %p131 = por %p129, %p130
      %p132 = scmp.ne.s32.totalorder %s118, %s119
      %p133 = scmp.eq.s32.totalorder %s22, 1
      %p134 = por %p132, %p133
      %p136 = scmp.ne.s32.totalorder %s119, %s135
      %p137 = scmp.eq.s32.totalorder %s22, 0
      %p138 = por %p136, %p137
      %p139 = scmp.le.s32.totalorder 1, %s16
      %p140 = scmp.lt.s32.totalorder %s16, 3
      %p141 = pnand %p139, %p140
      %p142 = pneg %p141
      // Predicated region
      $region9: #{tpu_custom_call.1} parent=5 // pred_check
        _
      $region10: #{tpu_custom_call.1} parent=5 // pred_check_branch
        %144 = sbr.rel (%p141) target = $region12
      $region11: #{tpu_custom_call.1} parent=5 // pred_region
        %s145 = ssub.s32 %s16, 1
        // Predicated region
        $region13: #{tpu_custom_call.1} parent=11 // pred_check
          %p146 = pneg %p75
        $region14: #{tpu_custom_call.1} parent=11 // pred_check_branch
          %148 = sbr.rel (%p146) target = $region16
        $region15: #{tpu_custom_call.1} parent=11 // pred_region
          _
        $region16: #{tpu_custom_call.1} parent=11 // pred_fallthru
          _
      $region12: #{tpu_custom_call.1} parent=5 // pred_fallthru
        _
      %p149 = scmp.lt.s32.totalorder %s16, 2
      // Predicated region
      $region17: #{tpu_custom_call.1} parent=5 // pred_check
        %p150 = pneg %p149
      $region18: #{tpu_custom_call.1} parent=5 // pred_check_branch
        %152 = sbr.rel (%p150) target = $region20
      $region19: #{tpu_custom_call.1} parent=5 // pred_region
        // Predicated region
        $region21: #{tpu_custom_call.1} parent=19 // pred_check
          %p153 = pneg %p48
        $region22: #{tpu_custom_call.1} parent=19 // pred_check_branch
          %155 = sbr.rel (%p153) target = $region24
        $region23: #{tpu_custom_call.1} parent=19 // pred_region
          %p156 = scmp.lt.s32.totalorder %s23, 1
          %s157 = scalar_select %p156, %s23, 1
          %s158 = smul.addr %s157, 54
          %s159 = smul.addr %s158, 4
          %s160 = scalar_lea.vmem %s0, %s159
        $region24: #{tpu_custom_call.1} parent=19 // pred_fallthru
          _
      $region20: #{tpu_custom_call.1} parent=5 // pred_fallthru
        _
      %p161 = scmp.le.s32.totalorder 1, %s16
      %p162 = scmp.lt.s32.totalorder %s16, 3
      %p163 = pnand %p161, %p162
      %p164 = pneg %p163
      // Predicated region
      $region25: #{tpu_custom_call.1} parent=5 // pred_check
        _
      $region26: #{tpu_custom_call.1} parent=5 // pred_check_branch
        %166 = sbr.rel (%p163) target = $region28
      $region27: #{tpu_custom_call.1} parent=5 // pred_region
        %s167 = ssub.s32 %s16, 1
        %p168 = scmp.lt.s32.totalorder %s25, 1
        %s169 = scalar_select %p168, %s25, 1
        %s170 = smul.addr %s169, 54
        %s171 = smul.addr %s170, 4
        %s172 = scalar_lea.vmem %s0, %s171
        %p173 = pneg %p54
        %p174 = pneg %p51
        %p175 = pneg %p75
        %p176 = pneg %p72
        %p177 = pneg %p103
        %p178 = pneg %p100
        %s179 = sand.u32 %s90, 1
        %s180 = scalar_lea.sflag [#allocation3], %s179
        %s181 = sand.u32 %s90, 1
        %s182 = smul.addr %s181, 128
        %s183 = scalar_lea.vmem [#allocation2], %s182
        %p184 = pneg %p131
        %p185 = pneg %p128
        %s186 = sand.u32 %s118, 1
        %s187 = scalar_lea.sflag [#allocation5], %s186
        %s188 = sand.u32 %s118, 1
        %s189 = smul.addr %s188, 2
        %s190 = scalar_lea.vmem [#allocation4], %s189
        %p191 = scmp.lt.s32.totalorder %s25, 1
        %s192 = scalar_select %p191, %s25, 1
        %s193 = smul.addr %s192, 54
        %s194 = smul.addr %s193, 4
        %s195 = scalar_lea.vmem %s0, %s194
        %s196 = smul.u32 32, %s26
        %s198 = smul.u32 %s26, 16
        %s199 = smul.u32 %s198, 3
        %s200 = smul.addr %s199, 4
        %s201 = scalar_lea.vmem %s195, %s200
        %v202 = vld [vmem:[%s201] sm:$0xf]
        %v203 = vld [vmem:[%s201 + $0x4] sm:$0xf]
        %v204 = vld [vmem:[%s201 + $0xc] sm:$0xf]
        %v205 = vld [vmem:[%s201 + $0x10] sm:$0xf]
        %v206 = vld [vmem:[%s201 + $0x18] sm:$0xf]
        %v207 = vld [vmem:[%s201 + $0x1c] sm:$0xf]
        %v208 = vld [vmem:[%s201 + $0x24] sm:$0xf]
        %v209 = vld [vmem:[%s201 + $0x28] sm:$0xf]
        %v210 = vld [vmem:[%s201 + $0x30] sm:$0xf]
        %v211 = vld [vmem:[%s201 + $0x34] sm:$0xf]
        %v212 = vld [vmem:[%s201 + $0x3c] sm:$0xf]
        %v213 = vld [vmem:[%s201 + $0x40] sm:$0xf]
        %v214 = vld [vmem:[%s201 + $0x48] sm:$0xf]
        %v215 = vld [vmem:[%s201 + $0x4c] sm:$0xf]
        %v216 = vld [vmem:[%s201 + $0x54] sm:$0xf]
        %v217 = vld [vmem:[%s201 + $0x58] sm:$0xf]
        %v218 = vld [vmem:[%s201 + $0x60] sm:$0xf]
        %v219 = vld [vmem:[%s201 + $0x64] sm:$0xf]
        %v220 = vld [vmem:[%s201 + $0x6c] sm:$0xf]
        %v221 = vld [vmem:[%s201 + $0x70] sm:$0xf]
        %v222 = vld [vmem:[%s201 + $0x78] sm:$0xf]
        %v223 = vld [vmem:[%s201 + $0x7c] sm:$0xf]
        %v224 = vld [vmem:[%s201 + $0x84] sm:$0xf]
        %v225 = vld [vmem:[%s201 + $0x88] sm:$0xf]
        %v226 = vld [vmem:[%s201 + $0x90] sm:$0xf]
        %v227 = vld [vmem:[%s201 + $0x94] sm:$0xf]
        %v228 = vld [vmem:[%s201 + $0x9c] sm:$0xf]
        %v229 = vld [vmem:[%s201 + $0xa0] sm:$0xf]
        %v230 = vld [vmem:[%s201 + $0xa8] sm:$0xf]
        %v231 = vld [vmem:[%s201 + $0xac] sm:$0xf]
        %v232 = vld [vmem:[%s201 + $0xb4] sm:$0xf]
        %v233 = vld [vmem:[%s201 + $0xb8] sm:$0xf]
        %v234 = vld [vmem:[%s201 + $0x8] sm:$0x1]
        %v235 = vld [vmem:[%s201 + $0x14] sm:$0x1]
        %v236 = vld [vmem:[%s201 + $0x20] sm:$0x1]
        %v237 = vld [vmem:[%s201 + $0x2c] sm:$0x1]
        %v238 = vld [vmem:[%s201 + $0x38] sm:$0x1]
        %v239 = vld [vmem:[%s201 + $0x44] sm:$0x1]
        %v240 = vld [vmem:[%s201 + $0x50] sm:$0x1]
        %v241 = vld [vmem:[%s201 + $0x5c] sm:$0x1]
        %v242 = vld [vmem:[%s201 + $0x68] sm:$0x1]
        %v243 = vld [vmem:[%s201 + $0x74] sm:$0x1]
        %v244 = vld [vmem:[%s201 + $0x80] sm:$0x1]
        %v245 = vld [vmem:[%s201 + $0x8c] sm:$0x1]
        %v246 = vld [vmem:[%s201 + $0x98] sm:$0x1]
        %v247 = vld [vmem:[%s201 + $0xa4] sm:$0x1]
        %v248 = vld [vmem:[%s201 + $0xb0] sm:$0x1]
        %v249 = vld [vmem:[%s201 + $0xbc] sm:$0x1]
        %vm250 = vsmask.f32 3328
        %vm251 = vsmask.f32 7440
        %vm252 = vmor %vm250, %vm251
        %v254 = vshrl.u32 %v202, 16
        %v256 = vrot.slane %v254, 4
        %v257 = vshll.u32 %v202, 16
        %v259 = vrot.slane %v257, 5
        %v260 = vor.u32 %v256, %v259
        %v261 = vrot.slane %v260, 4
        %v263 = vshll.u32 %v203, 16
        %v265 = vrot.slane %v263, 5
        %v266 = vsel %vm252, %v261, %v265
        %v267 = vshrl.u32 %v203, 16
        %v269 = vrot.slane %v267, 4
        %v270 = vor.u32 %v269, %v265
        %v271 = vrot.slane %v270, 4
        %v273 = vshll.u32 %v234, 16
        %v275 = vrot.slane %v273, 5
        %v276 = vsel %vm252, %v271, %v275
        %v278 = vshrl.u32 %v204, 16
        %v280 = vrot.slane %v278, 4
        %v281 = vshll.u32 %v204, 16
        %v283 = vrot.slane %v281, 5
        %v284 = vor.u32 %v280, %v283
        %v285 = vrot.slane %v284, 4
        %v287 = vshll.u32 %v205, 16
        %v289 = vrot.slane %v287, 5
        %v290 = vsel %vm252, %v285, %v289
        %v291 = vshrl.u32 %v205, 16
        %v293 = vrot.slane %v291, 4
        %v294 = vor.u32 %v293, %v289
        %v295 = vrot.slane %v294, 4
        %v297 = vshll.u32 %v235, 16
        %v299 = vrot.slane %v297, 5
        %v300 = vsel %vm252, %v295, %v299
        %v302 = vshrl.u32 %v206, 16
        %v304 = vrot.slane %v302, 4
        %v305 = vshll.u32 %v206, 16
        %v307 = vrot.slane %v305, 5
        %v308 = vor.u32 %v304, %v307
        %v309 = vrot.slane %v308, 4
        %v311 = vshll.u32 %v207, 16
        %v313 = vrot.slane %v311, 5
        %v314 = vsel %vm252, %v309, %v313
        %v315 = vshrl.u32 %v207, 16
        %v317 = vrot.slane %v315, 4
        %v318 = vor.u32 %v317, %v313
        %v319 = vrot.slane %v318, 4
        %v321 = vshll.u32 %v236, 16
        %v323 = vrot.slane %v321, 5
        %v324 = vsel %vm252, %v319, %v323
        %v326 = vshrl.u32 %v208, 16
        %v328 = vrot.slane %v326, 4
        %v329 = vshll.u32 %v208, 16
        %v331 = vrot.slane %v329, 5
        %v332 = vor.u32 %v328, %v331
        %v333 = vrot.slane %v332, 4
        %v335 = vshll.u32 %v209, 16
        %v337 = vrot.slane %v335, 5
        %v338 = vsel %vm252, %v333, %v337
        %v339 = vshrl.u32 %v209, 16
        %v341 = vrot.slane %v339, 4
        %v342 = vor.u32 %v341, %v337
        %v343 = vrot.slane %v342, 4
        %v345 = vshll.u32 %v237, 16
        %v347 = vrot.slane %v345, 5
        %v348 = vsel %vm252, %v343, %v347
        %v350 = vshrl.u32 %v210, 16
        %v352 = vrot.slane %v350, 4
        %v353 = vshll.u32 %v210, 16
        %v355 = vrot.slane %v353, 5
        %v356 = vor.u32 %v352, %v355
        %v357 = vrot.slane %v356, 4
        %v359 = vshll.u32 %v211, 16
        %v361 = vrot.slane %v359, 5
        %v362 = vsel %vm252, %v357, %v361
        %v363 = vshrl.u32 %v211, 16
        %v365 = vrot.slane %v363, 4
        %v366 = vor.u32 %v365, %v361
        %v367 = vrot.slane %v366, 4
        %v369 = vshll.u32 %v238, 16
        %v371 = vrot.slane %v369, 5
        %v372 = vsel %vm252, %v367, %v371
        %v374 = vshrl.u32 %v212, 16
        %v376 = vrot.slane %v374, 4
        %v377 = vshll.u32 %v212, 16
        %v379 = vrot.slane %v377, 5
        %v380 = vor.u32 %v376, %v379
        %v381 = vrot.slane %v380, 4
        %v383 = vshll.u32 %v213, 16
        %v385 = vrot.slane %v383, 5
        %v386 = vsel %vm252, %v381, %v385
        %v387 = vshrl.u32 %v213, 16
        %v389 = vrot.slane %v387, 4
        %v390 = vor.u32 %v389, %v385
        %v391 = vrot.slane %v390, 4
        %v393 = vshll.u32 %v239, 16
        %v395 = vrot.slane %v393, 5
        %v396 = vsel %vm252, %v391, %v395
        %v398 = vshrl.u32 %v214, 16
        %v400 = vrot.slane %v398, 4
        %v401 = vshll.u32 %v214, 16
        %v403 = vrot.slane %v401, 5
        %v404 = vor.u32 %v400, %v403
        %v405 = vrot.slane %v404, 4
        %v407 = vshll.u32 %v215, 16
        %v409 = vrot.slane %v407, 5
        %v410 = vsel %vm252, %v405, %v409
        %v411 = vshrl.u32 %v215, 16
        %v413 = vrot.slane %v411, 4
        %v414 = vor.u32 %v413, %v409
        %v415 = vrot.slane %v414, 4
        %v417 = vshll.u32 %v240, 16
        %v419 = vrot.slane %v417, 5
        %v420 = vsel %vm252, %v415, %v419
        %v422 = vshrl.u32 %v216, 16
        %v424 = vrot.slane %v422, 4
        %v425 = vshll.u32 %v216, 16
        %v427 = vrot.slane %v425, 5
        %v428 = vor.u32 %v424, %v427
        %v429 = vrot.slane %v428, 4
        %v431 = vshll.u32 %v217, 16
        %v433 = vrot.slane %v431, 5
        %v434 = vsel %vm252, %v429, %v433
        %v435 = vshrl.u32 %v217, 16
        %v437 = vrot.slane %v435, 4
        %v438 = vor.u32 %v437, %v433
        %v439 = vrot.slane %v438, 4
        %v441 = vshll.u32 %v241, 16
        %v443 = vrot.slane %v441, 5
        %v444 = vsel %vm252, %v439, %v443
        %v446 = vshrl.u32 %v218, 16
        %v448 = vrot.slane %v446, 4
        %v449 = vshll.u32 %v218, 16
        %v451 = vrot.slane %v449, 5
        %v452 = vor.u32 %v448, %v451
        %v453 = vrot.slane %v452, 4
        %v455 = vshll.u32 %v219, 16
        %v457 = vrot.slane %v455, 5
        %v458 = vsel %vm252, %v453, %v457
        %v459 = vshrl.u32 %v219, 16
        %v461 = vrot.slane %v459, 4
        %v462 = vor.u32 %v461, %v457
        %v463 = vrot.slane %v462, 4
        %v465 = vshll.u32 %v242, 16
        %v467 = vrot.slane %v465, 5
        %v468 = vsel %vm252, %v463, %v467
        %v470 = vshrl.u32 %v220, 16
        %v472 = vrot.slane %v470, 4
        %v473 = vshll.u32 %v220, 16
        %v475 = vrot.slane %v473, 5
        %v476 = vor.u32 %v472, %v475
        %v477 = vrot.slane %v476, 4
        %v479 = vshll.u32 %v221, 16
        %v481 = vrot.slane %v479, 5
        %v482 = vsel %vm252, %v477, %v481
        %v483 = vshrl.u32 %v221, 16
        %v485 = vrot.slane %v483, 4
        %v486 = vor.u32 %v485, %v481
        %v487 = vrot.slane %v486, 4
        %v489 = vshll.u32 %v243, 16
        %v491 = vrot.slane %v489, 5
        %v492 = vsel %vm252, %v487, %v491
        %v494 = vshrl.u32 %v222, 16
        %v496 = vrot.slane %v494, 4
        %v497 = vshll.u32 %v222, 16
        %v499 = vrot.slane %v497, 5
        %v500 = vor.u32 %v496, %v499
        %v501 = vrot.slane %v500, 4
        %v503 = vshll.u32 %v223, 16
        %v505 = vrot.slane %v503, 5
        %v506 = vsel %vm252, %v501, %v505
        %v507 = vshrl.u32 %v223, 16
        %v509 = vrot.slane %v507, 4
        %v510 = vor.u32 %v509, %v505
        %v511 = vrot.slane %v510, 4
        %v513 = vshll.u32 %v244, 16
        %v515 = vrot.slane %v513, 5
        %v516 = vsel %vm252, %v511, %v515
        %v518 = vshrl.u32 %v224, 16
        %v520 = vrot.slane %v518, 4
        %v521 = vshll.u32 %v224, 16
        %v523 = vrot.slane %v521, 5
        %v524 = vor.u32 %v520, %v523
        %v525 = vrot.slane %v524, 4
        %v527 = vshll.u32 %v225, 16
        %v529 = vrot.slane %v527, 5
        %v530 = vsel %vm252, %v525, %v529
        %v531 = vshrl.u32 %v225, 16
        %v533 = vrot.slane %v531, 4
        %v534 = vor.u32 %v533, %v529
        %v535 = vrot.slane %v534, 4
        %v537 = vshll.u32 %v245, 16
        %v539 = vrot.slane %v537, 5
        %v540 = vsel %vm252, %v535, %v539
        %v542 = vshrl.u32 %v226, 16
        %v544 = vrot.slane %v542, 4
        %v545 = vshll.u32 %v226, 16
        %v547 = vrot.slane %v545, 5
        %v548 = vor.u32 %v544, %v547
        %v549 = vrot.slane %v548, 4
        %v551 = vshll.u32 %v227, 16
        %v553 = vrot.slane %v551, 5
        %v554 = vsel %vm252, %v549, %v553
        %v555 = vshrl.u32 %v227, 16
        %v557 = vrot.slane %v555, 4
        %v558 = vor.u32 %v557, %v553
        %v559 = vrot.slane %v558, 4
        %v561 = vshll.u32 %v246, 16
        %v563 = vrot.slane %v561, 5
        %v564 = vsel %vm252, %v559, %v563
        %v566 = vshrl.u32 %v228, 16
        %v568 = vrot.slane %v566, 4
        %v569 = vshll.u32 %v228, 16
        %v571 = vrot.slane %v569, 5
        %v572 = vor.u32 %v568, %v571
        %v573 = vrot.slane %v572, 4
        %v575 = vshll.u32 %v229, 16
        %v577 = vrot.slane %v575, 5
        %v578 = vsel %vm252, %v573, %v577
        %v579 = vshrl.u32 %v229, 16
        %v581 = vrot.slane %v579, 4
        %v582 = vor.u32 %v581, %v577
        %v583 = vrot.slane %v582, 4
        %v585 = vshll.u32 %v247, 16
        %v587 = vrot.slane %v585, 5
        %v588 = vsel %vm252, %v583, %v587
        %v590 = vshrl.u32 %v230, 16
        %v592 = vrot.slane %v590, 4
        %v593 = vshll.u32 %v230, 16
        %v595 = vrot.slane %v593, 5
        %v596 = vor.u32 %v592, %v595
        %v597 = vrot.slane %v596, 4
        %v599 = vshll.u32 %v231, 16
        %v601 = vrot.slane %v599, 5
        %v602 = vsel %vm252, %v597, %v601
        %v603 = vshrl.u32 %v231, 16
        %v605 = vrot.slane %v603, 4
        %v606 = vor.u32 %v605, %v601
        %v607 = vrot.slane %v606, 4
        %v609 = vshll.u32 %v248, 16
        %v611 = vrot.slane %v609, 5
        %v612 = vsel %vm252, %v607, %v611
        %v614 = vshrl.u32 %v232, 16
        %v616 = vrot.slane %v614, 4
        %v617 = vshll.u32 %v232, 16
        %v619 = vrot.slane %v617, 5
        %v620 = vor.u32 %v616, %v619
        %v621 = vrot.slane %v620, 4
        %v623 = vshll.u32 %v233, 16
        %v625 = vrot.slane %v623, 5
        %v626 = vsel %vm252, %v621, %v625
        %v627 = vshrl.u32 %v233, 16
        %v629 = vrot.slane %v627, 4
        %v630 = vor.u32 %v629, %v625
        %v631 = vrot.slane %v630, 4
        %v633 = vshll.u32 %v249, 16
        %v635 = vrot.slane %v633, 5
        %v636 = vsel %vm252, %v631, %v635
        %v637 = vld [vmem:[%s201] sm:$0xe]
        %v638 = vld [vmem:[%s201 + $0xc] sm:$0xe]
        %v639 = vld [vmem:[%s201 + $0x18] sm:$0xe]
        %v640 = vld [vmem:[%s201 + $0x24] sm:$0xe]
        %v641 = vld [vmem:[%s201 + $0x30] sm:$0xe]
        %v642 = vld [vmem:[%s201 + $0x3c] sm:$0xe]
        %v643 = vld [vmem:[%s201 + $0x48] sm:$0xe]
        %v644 = vld [vmem:[%s201 + $0x54] sm:$0xe]
        %v645 = vld [vmem:[%s201 + $0x60] sm:$0xe]
        %v646 = vld [vmem:[%s201 + $0x6c] sm:$0xe]
        %v647 = vld [vmem:[%s201 + $0x78] sm:$0xe]
        %v648 = vld [vmem:[%s201 + $0x84] sm:$0xe]
        %v649 = vld [vmem:[%s201 + $0x90] sm:$0xe]
        %v650 = vld [vmem:[%s201 + $0x9c] sm:$0xe]
        %v651 = vld [vmem:[%s201 + $0xa8] sm:$0xe]
        %v652 = vld [vmem:[%s201 + $0xb4] sm:$0xe]
        %vm701 = vcmask 1042432
        %vm702 = vcmask 1046532
        %vm703 = vmor %vm701, %vm702
        %v704 = vrot.slane %v637, 5
        %v705 = vrot.slane %v704, 4
        %v706 = vrot.slane %v203, 5
        %v707 = vsel %vm703, %v705, %v706
        %v708 = vrot.slane %v706, 4
        %v709 = vrot.slane %v234, 5
        %v710 = vsel %vm703, %v708, %v709
        %v711 = vrot.slane %v638, 5
        %v712 = vrot.slane %v711, 4
        %v713 = vrot.slane %v205, 5
        %v714 = vsel %vm703, %v712, %v713
        %v715 = vrot.slane %v713, 4
        %v716 = vrot.slane %v235, 5
        %v717 = vsel %vm703, %v715, %v716
        %v718 = vrot.slane %v639, 5
        %v719 = vrot.slane %v718, 4
        %v720 = vrot.slane %v207, 5
        %v721 = vsel %vm703, %v719, %v720
        %v722 = vrot.slane %v720, 4
        %v723 = vrot.slane %v236, 5
        %v724 = vsel %vm703, %v722, %v723
        %v725 = vrot.slane %v640, 5
        %v726 = vrot.slane %v725, 4
        %v727 = vrot.slane %v209, 5
        %v728 = vsel %vm703, %v726, %v727
        %v729 = vrot.slane %v727, 4
        %v730 = vrot.slane %v237, 5
        %v731 = vsel %vm703, %v729, %v730
        %v732 = vrot.slane %v641, 5
        %v733 = vrot.slane %v732, 4
        %v734 = vrot.slane %v211, 5
        %v735 = vsel %vm703, %v733, %v734
        %v736 = vrot.slane %v734, 4
        %v737 = vrot.slane %v238, 5
        %v738 = vsel %vm703, %v736, %v737
        %v739 = vrot.slane %v642, 5
        %v740 = vrot.slane %v739, 4
        %v741 = vrot.slane %v213, 5
        %v742 = vsel %vm703, %v740, %v741
        %v743 = vrot.slane %v741, 4
        %v744 = vrot.slane %v239, 5
        %v745 = vsel %vm703, %v743, %v744
        %v746 = vrot.slane %v643, 5
        %v747 = vrot.slane %v746, 4
        %v748 = vrot.slane %v215, 5
        %v749 = vsel %vm703, %v747, %v748
        %v750 = vrot.slane %v748, 4
        %v751 = vrot.slane %v240, 5
        %v752 = vsel %vm703, %v750, %v751
        %v753 = vrot.slane %v644, 5
        %v754 = vrot.slane %v753, 4
        %v755 = vrot.slane %v217, 5
        %v756 = vsel %vm703, %v754, %v755
        %v757 = vrot.slane %v755, 4
        %v758 = vrot.slane %v241, 5
        %v759 = vsel %vm703, %v757, %v758
        %v760 = vrot.slane %v645, 5
        %v761 = vrot.slane %v760, 4
        %v762 = vrot.slane %v219, 5
        %v763 = vsel %vm703, %v761, %v762
        %v764 = vrot.slane %v762, 4
        %v765 = vrot.slane %v242, 5
        %v766 = vsel %vm703, %v764, %v765
        %v767 = vrot.slane %v646, 5
        %v768 = vrot.slane %v767, 4
        %v769 = vrot.slane %v221, 5
        %v770 = vsel %vm703, %v768, %v769
        %v771 = vrot.slane %v769, 4
        %v772 = vrot.slane %v243, 5
        %v773 = vsel %vm703, %v771, %v772
        %v774 = vrot.slane %v647, 5
        %v775 = vrot.slane %v774, 4
        %v776 = vrot.slane %v223, 5
        %v777 = vsel %vm703, %v775, %v776
        %v778 = vrot.slane %v776, 4
        %v779 = vrot.slane %v244, 5
        %v780 = vsel %vm703, %v778, %v779
        %v781 = vrot.slane %v648, 5
        %v782 = vrot.slane %v781, 4
        %v783 = vrot.slane %v225, 5
        %v784 = vsel %vm703, %v782, %v783
        %v785 = vrot.slane %v783, 4
        %v786 = vrot.slane %v245, 5
        %v787 = vsel %vm703, %v785, %v786
        %v788 = vrot.slane %v649, 5
        %v789 = vrot.slane %v788, 4
        %v790 = vrot.slane %v227, 5
        %v791 = vsel %vm703, %v789, %v790
        %v792 = vrot.slane %v790, 4
        %v793 = vrot.slane %v246, 5
        %v794 = vsel %vm703, %v792, %v793
        %v795 = vrot.slane %v650, 5
        %v796 = vrot.slane %v795, 4
        %v797 = vrot.slane %v229, 5
        %v798 = vsel %vm703, %v796, %v797
        %v799 = vrot.slane %v797, 4
        %v800 = vrot.slane %v247, 5
        %v801 = vsel %vm703, %v799, %v800
        %v802 = vrot.slane %v651, 5
        %v803 = vrot.slane %v802, 4
        %v804 = vrot.slane %v231, 5
        %v805 = vsel %vm703, %v803, %v804
        %v806 = vrot.slane %v804, 4
        %v807 = vrot.slane %v248, 5
        %v808 = vsel %vm703, %v806, %v807
        %v809 = vrot.slane %v652, 5
        %v810 = vrot.slane %v809, 4
        %v811 = vrot.slane %v233, 5
        %v812 = vsel %vm703, %v810, %v811
        %v813 = vrot.slane %v811, 4
        %v814 = vrot.slane %v249, 5
        %v815 = vsel %vm703, %v813, %v814
        %s816 = sadd.s32 %s198, 1
        %s817 = smul.u32 %s816, 3
        %s818 = smul.addr %s817, 4
        %s819 = scalar_lea.vmem %s195, %s818
        %v820 = vld [vmem:[%s819] sm:$0xf]
        %v821 = vld [vmem:[%s819 + $0x4] sm:$0xf]
        %v822 = vld [vmem:[%s819 + $0xc] sm:$0xf]
        %v823 = vld [vmem:[%s819 + $0x10] sm:$0xf]
        %v824 = vld [vmem:[%s819 + $0x18] sm:$0xf]
        %v825 = vld [vmem:[%s819 + $0x1c] sm:$0xf]
        %v826 = vld [vmem:[%s819 + $0x24] sm:$0xf]
        %v827 = vld [vmem:[%s819 + $0x28] sm:$0xf]
        %v828 = vld [vmem:[%s819 + $0x30] sm:$0xf]
        %v829 = vld [vmem:[%s819 + $0x34] sm:$0xf]
        %v830 = vld [vmem:[%s819 + $0x3c] sm:$0xf]
        %v831 = vld [vmem:[%s819 + $0x40] sm:$0xf]
        %v832 = vld [vmem:[%s819 + $0x48] sm:$0xf]
        %v833 = vld [vmem:[%s819 + $0x4c] sm:$0xf]
        %v834 = vld [vmem:[%s819 + $0x54] sm:$0xf]
        %v835 = vld [vmem:[%s819 + $0x58] sm:$0xf]
        %v836 = vld [vmem:[%s819 + $0x60] sm:$0xf]
        %v837 = vld [vmem:[%s819 + $0x64] sm:$0xf]
        %v838 = vld [vmem:[%s819 + $0x6c] sm:$0xf]
        %v839 = vld [vmem:[%s819 + $0x70] sm:$0xf]
        %v840 = vld [vmem:[%s819 + $0x78] sm:$0xf]
        %v841 = vld [vmem:[%s819 + $0x7c] sm:$0xf]
        %v842 = vld [vmem:[%s819 + $0x84] sm:$0xf]
        %v843 = vld [vmem:[%s819 + $0x88] sm:$0xf]
        %v844 = vld [vmem:[%s819 + $0x90] sm:$0xf]
        %v845 = vld [vmem:[%s819 + $0x94] sm:$0xf]
        %v846 = vld [vmem:[%s819 + $0x9c] sm:$0xf]
        %v847 = vld [vmem:[%s819 + $0xa0] sm:$0xf]
        %v848 = vld [vmem:[%s819 + $0xa8] sm:$0xf]
        %v849 = vld [vmem:[%s819 + $0xac] sm:$0xf]
        %v850 = vld [vmem:[%s819 + $0xb4] sm:$0xf]
        %v851 = vld [vmem:[%s819 + $0xb8] sm:$0xf]
        %v852 = vld [vmem:[%s819 + $0x8] sm:$0x1]
        %v853 = vld [vmem:[%s819 + $0x14] sm:$0x1]
        %v854 = vld [vmem:[%s819 + $0x20] sm:$0x1]
        %v855 = vld [vmem:[%s819 + $0x2c] sm:$0x1]
        %v856 = vld [vmem:[%s819 + $0x38] sm:$0x1]
        %v857 = vld [vmem:[%s819 + $0x44] sm:$0x1]
        %v858 = vld [vmem:[%s819 + $0x50] sm:$0x1]
        %v859 = vld [vmem:[%s819 + $0x5c] sm:$0x1]
        %v860 = vld [vmem:[%s819 + $0x68] sm:$0x1]
        %v861 = vld [vmem:[%s819 + $0x74] sm:$0x1]
        %v862 = vld [vmem:[%s819 + $0x80] sm:$0x1]
        %v863 = vld [vmem:[%s819 + $0x8c] sm:$0x1]
        %v864 = vld [vmem:[%s819 + $0x98] sm:$0x1]
        %v865 = vld [vmem:[%s819 + $0xa4] sm:$0x1]
        %v866 = vld [vmem:[%s819 + $0xb0] sm:$0x1]
        %v867 = vld [vmem:[%s819 + $0xbc] sm:$0x1]
        %v869 = vshrl.u32 %v820, 16
        %v871 = vrot.slane %v869, 4
        %v872 = vshll.u32 %v820, 16
        %v874 = vrot.slane %v872, 5
        %v875 = vor.u32 %v871, %v874
        %v876 = vrot.slane %v875, 4
        %v878 = vshll.u32 %v821, 16
        %v880 = vrot.slane %v878, 5
        %v881 = vsel %vm252, %v876, %v880
        %v882 = vshrl.u32 %v821, 16
        %v884 = vrot.slane %v882, 4
        %v885 = vor.u32 %v884, %v880
        %v886 = vrot.slane %v885, 4
        %v888 = vshll.u32 %v852, 16
        %v890 = vrot.slane %v888, 5
        %v891 = vsel %vm252, %v886, %v890
        %v893 = vshrl.u32 %v822, 16
        %v895 = vrot.slane %v893, 4
        %v896 = vshll.u32 %v822, 16
        %v898 = vrot.slane %v896, 5
        %v899 = vor.u32 %v895, %v898
        %v900 = vrot.slane %v899, 4
        %v902 = vshll.u32 %v823, 16
        %v904 = vrot.slane %v902, 5
        %v905 = vsel %vm252, %v900, %v904
        %v906 = vshrl.u32 %v823, 16
        %v908 = vrot.slane %v906, 4
        %v909 = vor.u32 %v908, %v904
        %v910 = vrot.slane %v909, 4
        %v912 = vshll.u32 %v853, 16
        %v914 = vrot.slane %v912, 5
        %v915 = vsel %vm252, %v910, %v914
        %v917 = vshrl.u32 %v824, 16
        %v919 = vrot.slane %v917, 4
        %v920 = vshll.u32 %v824, 16
        %v922 = vrot.slane %v920, 5
        %v923 = vor.u32 %v919, %v922
        %v924 = vrot.slane %v923, 4
        %v926 = vshll.u32 %v825, 16
        %v928 = vrot.slane %v926, 5
        %v929 = vsel %vm252, %v924, %v928
        %v930 = vshrl.u32 %v825, 16
        %v932 = vrot.slane %v930, 4
        %v933 = vor.u32 %v932, %v928
        %v934 = vrot.slane %v933, 4
        %v936 = vshll.u32 %v854, 16
        %v938 = vrot.slane %v936, 5
        %v939 = vsel %vm252, %v934, %v938
        %v941 = vshrl.u32 %v826, 16
        %v943 = vrot.slane %v941, 4
        %v944 = vshll.u32 %v826, 16
        %v946 = vrot.slane %v944, 5
        %v947 = vor.u32 %v943, %v946
        %v948 = vrot.slane %v947, 4
        %v950 = vshll.u32 %v827, 16
        %v952 = vrot.slane %v950, 5
        %v953 = vsel %vm252, %v948, %v952
        %v954 = vshrl.u32 %v827, 16
        %v956 = vrot.slane %v954, 4
        %v957 = vor.u32 %v956, %v952
        %v958 = vrot.slane %v957, 4
        %v960 = vshll.u32 %v855, 16
        %v962 = vrot.slane %v960, 5
        %v963 = vsel %vm252, %v958, %v962
        %v965 = vshrl.u32 %v828, 16
        %v967 = vrot.slane %v965, 4
        %v968 = vshll.u32 %v828, 16
        %v970 = vrot.slane %v968, 5
        %v971 = vor.u32 %v967, %v970
        %v972 = vrot.slane %v971, 4
        %v974 = vshll.u32 %v829, 16
        %v976 = vrot.slane %v974, 5
        %v977 = vsel %vm252, %v972, %v976
        %v978 = vshrl.u32 %v829, 16
        %v980 = vrot.slane %v978, 4
        %v981 = vor.u32 %v980, %v976
        %v982 = vrot.slane %v981, 4
        %v984 = vshll.u32 %v856, 16
        %v986 = vrot.slane %v984, 5
        %v987 = vsel %vm252, %v982, %v986
        %v989 = vshrl.u32 %v830, 16
        %v991 = vrot.slane %v989, 4
        %v992 = vshll.u32 %v830, 16
        %v994 = vrot.slane %v992, 5
        %v995 = vor.u32 %v991, %v994
        %v996 = vrot.slane %v995, 4
        %v998 = vshll.u32 %v831, 16
        %v1000 = vrot.slane %v998, 5
        %v1001 = vsel %vm252, %v996, %v1000
        %v1002 = vshrl.u32 %v831, 16
        %v1004 = vrot.slane %v1002, 4
        %v1005 = vor.u32 %v1004, %v1000
        %v1006 = vrot.slane %v1005, 4
        %v1008 = vshll.u32 %v857, 16
        %v1010 = vrot.slane %v1008, 5
        %v1011 = vsel %vm252, %v1006, %v1010
        %v1013 = vshrl.u32 %v832, 16
        %v1015 = vrot.slane %v1013, 4
        %v1016 = vshll.u32 %v832, 16
        %v1018 = vrot.slane %v1016, 5
        %v1019 = vor.u32 %v1015, %v1018
        %v1020 = vrot.slane %v1019, 4
        %v1022 = vshll.u32 %v833, 16
        %v1024 = vrot.slane %v1022, 5
        %v1025 = vsel %vm252, %v1020, %v1024
        %v1026 = vshrl.u32 %v833, 16
        %v1028 = vrot.slane %v1026, 4
        %v1029 = vor.u32 %v1028, %v1024
        %v1030 = vrot.slane %v1029, 4
        %v1032 = vshll.u32 %v858, 16
        %v1034 = vrot.slane %v1032, 5
        %v1035 = vsel %vm252, %v1030, %v1034
        %v1037 = vshrl.u32 %v834, 16
        %v1039 = vrot.slane %v1037, 4
        %v1040 = vshll.u32 %v834, 16
        %v1042 = vrot.slane %v1040, 5
        %v1043 = vor.u32 %v1039, %v1042
        %v1044 = vrot.slane %v1043, 4
        %v1046 = vshll.u32 %v835, 16
        %v1048 = vrot.slane %v1046, 5
        %v1049 = vsel %vm252, %v1044, %v1048
        %v1050 = vshrl.u32 %v835, 16
        %v1052 = vrot.slane %v1050, 4
        %v1053 = vor.u32 %v1052, %v1048
        %v1054 = vrot.slane %v1053, 4
        %v1056 = vshll.u32 %v859, 16
        %v1058 = vrot.slane %v1056, 5
        %v1059 = vsel %vm252, %v1054, %v1058
        %v1061 = vshrl.u32 %v836, 16
        %v1063 = vrot.slane %v1061, 4
        %v1064 = vshll.u32 %v836, 16
        %v1066 = vrot.slane %v1064, 5
        %v1067 = vor.u32 %v1063, %v1066
        %v1068 = vrot.slane %v1067, 4
        %v1070 = vshll.u32 %v837, 16
        %v1072 = vrot.slane %v1070, 5
        %v1073 = vsel %vm252, %v1068, %v1072
        %v1074 = vshrl.u32 %v837, 16
        %v1076 = vrot.slane %v1074, 4
        %v1077 = vor.u32 %v1076, %v1072
        %v1078 = vrot.slane %v1077, 4
        %v1080 = vshll.u32 %v860, 16
        %v1082 = vrot.slane %v1080, 5
        %v1083 = vsel %vm252, %v1078, %v1082
        %v1085 = vshrl.u32 %v838, 16
        %v1087 = vrot.slane %v1085, 4
        %v1088 = vshll.u32 %v838, 16
        %v1090 = vrot.slane %v1088, 5
        %v1091 = vor.u32 %v1087, %v1090
        %v1092 = vrot.slane %v1091, 4
        %v1094 = vshll.u32 %v839, 16
        %v1096 = vrot.slane %v1094, 5
        %v1097 = vsel %vm252, %v1092, %v1096
        %v1098 = vshrl.u32 %v839, 16
        %v1100 = vrot.slane %v1098, 4
        %v1101 = vor.u32 %v1100, %v1096
        %v1102 = vrot.slane %v1101, 4
        %v1104 = vshll.u32 %v861, 16
        %v1106 = vrot.slane %v1104, 5
        %v1107 = vsel %vm252, %v1102, %v1106
        %v1109 = vshrl.u32 %v840, 16
        %v1111 = vrot.slane %v1109, 4
        %v1112 = vshll.u32 %v840, 16
        %v1114 = vrot.slane %v1112, 5
        %v1115 = vor.u32 %v1111, %v1114
        %v1116 = vrot.slane %v1115, 4
        %v1118 = vshll.u32 %v841, 16
        %v1120 = vrot.slane %v1118, 5
        %v1121 = vsel %vm252, %v1116, %v1120
        %v1122 = vshrl.u32 %v841, 16
        %v1124 = vrot.slane %v1122, 4
        %v1125 = vor.u32 %v1124, %v1120
        %v1126 = vrot.slane %v1125, 4
        %v1128 = vshll.u32 %v862, 16
        %v1130 = vrot.slane %v1128, 5
        %v1131 = vsel %vm252, %v1126, %v1130
        %v1133 = vshrl.u32 %v842, 16
        %v1135 = vrot.slane %v1133, 4
        %v1136 = vshll.u32 %v842, 16
        %v1138 = vrot.slane %v1136, 5
        %v1139 = vor.u32 %v1135, %v1138
        %v1140 = vrot.slane %v1139, 4
        %v1142 = vshll.u32 %v843, 16
        %v1144 = vrot.slane %v1142, 5
        %v1145 = vsel %vm252, %v1140, %v1144
        %v1146 = vshrl.u32 %v843, 16
        %v1148 = vrot.slane %v1146, 4
        %v1149 = vor.u32 %v1148, %v1144
        %v1150 = vrot.slane %v1149, 4
        %v1152 = vshll.u32 %v863, 16
        %v1154 = vrot.slane %v1152, 5
        %v1155 = vsel %vm252, %v1150, %v1154
        %v1157 = vshrl.u32 %v844, 16
        %v1159 = vrot.slane %v1157, 4
        %v1160 = vshll.u32 %v844, 16
        %v1162 = vrot.slane %v1160, 5
        %v1163 = vor.u32 %v1159, %v1162
        %v1164 = vrot.slane %v1163, 4
        %v1166 = vshll.u32 %v845, 16
        %v1168 = vrot.slane %v1166, 5
        %v1169 = vsel %vm252, %v1164, %v1168
        %v1170 = vshrl.u32 %v845, 16
        %v1172 = vrot.slane %v1170, 4
        %v1173 = vor.u32 %v1172, %v1168
        %v1174 = vrot.slane %v1173, 4
        %v1176 = vshll.u32 %v864, 16
        %v1178 = vrot.slane %v1176, 5
        %v1179 = vsel %vm252, %v1174, %v1178
        %v1181 = vshrl.u32 %v846, 16
        %v1183 = vrot.slane %v1181, 4
        %v1184 = vshll.u32 %v846, 16
        %v1186 = vrot.slane %v1184, 5
        %v1187 = vor.u32 %v1183, %v1186
        %v1188 = vrot.slane %v1187, 4
        %v1190 = vshll.u32 %v847, 16
        %v1192 = vrot.slane %v1190, 5
        %v1193 = vsel %vm252, %v1188, %v1192
        %v1194 = vshrl.u32 %v847, 16
        %v1196 = vrot.slane %v1194, 4
        %v1197 = vor.u32 %v1196, %v1192
        %v1198 = vrot.slane %v1197, 4
        %v1200 = vshll.u32 %v865, 16
        %v1202 = vrot.slane %v1200, 5
        %v1203 = vsel %vm252, %v1198, %v1202
        %v1205 = vshrl.u32 %v848, 16
        %v1207 = vrot.slane %v1205, 4
        %v1208 = vshll.u32 %v848, 16
        %v1210 = vrot.slane %v1208, 5
        %v1211 = vor.u32 %v1207, %v1210
        %v1212 = vrot.slane %v1211, 4
        %v1214 = vshll.u32 %v849, 16
        %v1216 = vrot.slane %v1214, 5
        %v1217 = vsel %vm252, %v1212, %v1216
        %v1218 = vshrl.u32 %v849, 16
        %v1220 = vrot.slane %v1218, 4
        %v1221 = vor.u32 %v1220, %v1216
        %v1222 = vrot.slane %v1221, 4
        %v1224 = vshll.u32 %v866, 16
        %v1226 = vrot.slane %v1224, 5
        %v1227 = vsel %vm252, %v1222, %v1226
        %v1229 = vshrl.u32 %v850, 16
        %v1231 = vrot.slane %v1229, 4
        %v1232 = vshll.u32 %v850, 16
        %v1234 = vrot.slane %v1232, 5
        %v1235 = vor.u32 %v1231, %v1234
        %v1236 = vrot.slane %v1235, 4
        %v1238 = vshll.u32 %v851, 16
        %v1240 = vrot.slane %v1238, 5
        %v1241 = vsel %vm252, %v1236, %v1240
        %v1242 = vshrl.u32 %v851, 16
        %v1244 = vrot.slane %v1242, 4
        %v1245 = vor.u32 %v1244, %v1240
        %v1246 = vrot.slane %v1245, 4
        %v1248 = vshll.u32 %v867, 16
        %v1250 = vrot.slane %v1248, 5
        %v1251 = vsel %vm252, %v1246, %v1250
        %v1252 = vld [vmem:[%s819] sm:$0xe]
        %v1253 = vld [vmem:[%s819 + $0xc] sm:$0xe]
        %v1254 = vld [vmem:[%s819 + $0x18] sm:$0xe]
        %v1255 = vld [vmem:[%s819 + $0x24] sm:$0xe]
        %v1256 = vld [vmem:[%s819 + $0x30] sm:$0xe]
        %v1257 = vld [vmem:[%s819 + $0x3c] sm:$0xe]
        %v1258 = vld [vmem:[%s819 + $0x48] sm:$0xe]
        %v1259 = vld [vmem:[%s819 + $0x54] sm:$0xe]
        %v1260 = vld [vmem:[%s819 + $0x60] sm:$0xe]
        %v1261 = vld [vmem:[%s819 + $0x6c] sm:$0xe]
        %v1262 = vld [vmem:[%s819 + $0x78] sm:$0xe]
        %v1263 = vld [vmem:[%s819 + $0x84] sm:$0xe]
        %v1264 = vld [vmem:[%s819 + $0x90] sm:$0xe]
        %v1265 = vld [vmem:[%s819 + $0x9c] sm:$0xe]
        %v1266 = vld [vmem:[%s819 + $0xa8] sm:$0xe]
        %v1267 = vld [vmem:[%s819 + $0xb4] sm:$0xe]
        %v1316 = vrot.slane %v1252, 5
        %v1317 = vrot.slane %v1316, 4
        %v1318 = vrot.slane %v821, 5
        %v1319 = vsel %vm703, %v1317, %v1318
        %v1320 = vrot.slane %v1318, 4
        %v1321 = vrot.slane %v852, 5
        %v1322 = vsel %vm703, %v1320, %v1321
        %v1323 = vrot.slane %v1253, 5
        %v1324 = vrot.slane %v1323, 4
        %v1325 = vrot.slane %v823, 5
        %v1326 = vsel %vm703, %v1324, %v1325
        %v1327 = vrot.slane %v1325, 4
        %v1328 = vrot.slane %v853, 5
        %v1329 = vsel %vm703, %v1327, %v1328
        %v1330 = vrot.slane %v1254, 5
        %v1331 = vrot.slane %v1330, 4
        %v1332 = vrot.slane %v825, 5
        %v1333 = vsel %vm703, %v1331, %v1332
        %v1334 = vrot.slane %v1332, 4
        %v1335 = vrot.slane %v854, 5
        %v1336 = vsel %vm703, %v1334, %v1335
        %v1337 = vrot.slane %v1255, 5
        %v1338 = vrot.slane %v1337, 4
        %v1339 = vrot.slane %v827, 5
        %v1340 = vsel %vm703, %v1338, %v1339
        %v1341 = vrot.slane %v1339, 4
        %v1342 = vrot.slane %v855, 5
        %v1343 = vsel %vm703, %v1341, %v1342
        %v1344 = vrot.slane %v1256, 5
        %v1345 = vrot.slane %v1344, 4
        %v1346 = vrot.slane %v829, 5
        %v1347 = vsel %vm703, %v1345, %v1346
        %v1348 = vrot.slane %v1346, 4
        %v1349 = vrot.slane %v856, 5
        %v1350 = vsel %vm703, %v1348, %v1349
        %v1351 = vrot.slane %v1257, 5
        %v1352 = vrot.slane %v1351, 4
        %v1353 = vrot.slane %v831, 5
        %v1354 = vsel %vm703, %v1352, %v1353
        %v1355 = vrot.slane %v1353, 4
        %v1356 = vrot.slane %v857, 5
        %v1357 = vsel %vm703, %v1355, %v1356
        %v1358 = vrot.slane %v1258, 5
        %v1359 = vrot.slane %v1358, 4
        %v1360 = vrot.slane %v833, 5
        %v1361 = vsel %vm703, %v1359, %v1360
        %v1362 = vrot.slane %v1360, 4
        %v1363 = vrot.slane %v858, 5
        %v1364 = vsel %vm703, %v1362, %v1363
        %v1365 = vrot.slane %v1259, 5
        %v1366 = vrot.slane %v1365, 4
        %v1367 = vrot.slane %v835, 5
        %v1368 = vsel %vm703, %v1366, %v1367
        %v1369 = vrot.slane %v1367, 4
        %v1370 = vrot.slane %v859, 5
        %v1371 = vsel %vm703, %v1369, %v1370
        %v1372 = vrot.slane %v1260, 5
        %v1373 = vrot.slane %v1372, 4
        %v1374 = vrot.slane %v837, 5
        %v1375 = vsel %vm703, %v1373, %v1374
        %v1376 = vrot.slane %v1374, 4
        %v1377 = vrot.slane %v860, 5
        %v1378 = vsel %vm703, %v1376, %v1377
        %v1379 = vrot.slane %v1261, 5
        %v1380 = vrot.slane %v1379, 4
        %v1381 = vrot.slane %v839, 5
        %v1382 = vsel %vm703, %v1380, %v1381
        %v1383 = vrot.slane %v1381, 4
        %v1384 = vrot.slane %v861, 5
        %v1385 = vsel %vm703, %v1383, %v1384
        %v1386 = vrot.slane %v1262, 5
        %v1387 = vrot.slane %v1386, 4
        %v1388 = vrot.slane %v841, 5
        %v1389 = vsel %vm703, %v1387, %v1388
        %v1390 = vrot.slane %v1388, 4
        %v1391 = vrot.slane %v862, 5
        %v1392 = vsel %vm703, %v1390, %v1391
        %v1393 = vrot.slane %v1263, 5
        %v1394 = vrot.slane %v1393, 4
        %v1395 = vrot.slane %v843, 5
        %v1396 = vsel %vm703, %v1394, %v1395
        %v1397 = vrot.slane %v1395, 4
        %v1398 = vrot.slane %v863, 5
        %v1399 = vsel %vm703, %v1397, %v1398
        %v1400 = vrot.slane %v1264, 5
        %v1401 = vrot.slane %v1400, 4
        %v1402 = vrot.slane %v845, 5
        %v1403 = vsel %vm703, %v1401, %v1402
        %v1404 = vrot.slane %v1402, 4
        %v1405 = vrot.slane %v864, 5
        %v1406 = vsel %vm703, %v1404, %v1405
        %v1407 = vrot.slane %v1265, 5
        %v1408 = vrot.slane %v1407, 4
        %v1409 = vrot.slane %v847, 5
        %v1410 = vsel %vm703, %v1408, %v1409
        %v1411 = vrot.slane %v1409, 4
        %v1412 = vrot.slane %v865, 5
        %v1413 = vsel %vm703, %v1411, %v1412
        %v1414 = vrot.slane %v1266, 5
        %v1415 = vrot.slane %v1414, 4
        %v1416 = vrot.slane %v849, 5
        %v1417 = vsel %vm703, %v1415, %v1416
        %v1418 = vrot.slane %v1416, 4
        %v1419 = vrot.slane %v866, 5
        %v1420 = vsel %vm703, %v1418, %v1419
        %v1421 = vrot.slane %v1267, 5
        %v1422 = vrot.slane %v1421, 4
        %v1423 = vrot.slane %v851, 5
        %v1424 = vsel %vm703, %v1422, %v1423
        %v1425 = vrot.slane %v1423, 4
        %v1426 = vrot.slane %v867, 5
        %v1427 = vsel %vm703, %v1425, %v1426
        %s1428 = sadd.s32 %s198, 2
        %s1429 = smul.u32 %s1428, 3
        %s1430 = smul.addr %s1429, 4
        %s1431 = scalar_lea.vmem %s195, %s1430
        %v1432 = vld [vmem:[%s1431] sm:$0xf]
        %v1433 = vld [vmem:[%s1431 + $0x4] sm:$0xf]
        %v1434 = vld [vmem:[%s1431 + $0xc] sm:$0xf]
        %v1435 = vld [vmem:[%s1431 + $0x10] sm:$0xf]
        %v1436 = vld [vmem:[%s1431 + $0x18] sm:$0xf]
        %v1437 = vld [vmem:[%s1431 + $0x1c] sm:$0xf]
        %v1438 = vld [vmem:[%s1431 + $0x24] sm:$0xf]
        %v1439 = vld [vmem:[%s1431 + $0x28] sm:$0xf]
        %v1440 = vld [vmem:[%s1431 + $0x30] sm:$0xf]
        %v1441 = vld [vmem:[%s1431 + $0x34] sm:$0xf]
        %v1442 = vld [vmem:[%s1431 + $0x3c] sm:$0xf]
        %v1443 = vld [vmem:[%s1431 + $0x40] sm:$0xf]
        %v1444 = vld [vmem:[%s1431 + $0x48] sm:$0xf]
        %v1445 = vld [vmem:[%s1431 + $0x4c] sm:$0xf]
        %v1446 = vld [vmem:[%s1431 + $0x54] sm:$0xf]
        %v1447 = vld [vmem:[%s1431 + $0x58] sm:$0xf]
        %v1448 = vld [vmem:[%s1431 + $0x60] sm:$0xf]
        %v1449 = vld [vmem:[%s1431 + $0x64] sm:$0xf]
        %v1450 = vld [vmem:[%s1431 + $0x6c] sm:$0xf]
        %v1451 = vld [vmem:[%s1431 + $0x70] sm:$0xf]
        %v1452 = vld [vmem:[%s1431 + $0x78] sm:$0xf]
        %v1453 = vld [vmem:[%s1431 + $0x7c] sm:$0xf]
        %v1454 = vld [vmem:[%s1431 + $0x84] sm:$0xf]
        %v1455 = vld [vmem:[%s1431 + $0x88] sm:$0xf]
        %v1456 = vld [vmem:[%s1431 + $0x90] sm:$0xf]
        %v1457 = vld [vmem:[%s1431 + $0x94] sm:$0xf]
        %v1458 = vld [vmem:[%s1431 + $0x9c] sm:$0xf]
        %v1459 = vld [vmem:[%s1431 + $0xa0] sm:$0xf]
        %v1460 = vld [vmem:[%s1431 + $0xa8] sm:$0xf]
        %v1461 = vld [vmem:[%s1431 + $0xac] sm:$0xf]
        %v1462 = vld [vmem:[%s1431 + $0xb4] sm:$0xf]
        %v1463 = vld [vmem:[%s1431 + $0xb8] sm:$0xf]
        %v1464 = vld [vmem:[%s1431 + $0x8] sm:$0x1]
        %v1465 = vld [vmem:[%s1431 + $0x14] sm:$0x1]
        %v1466 = vld [vmem:[%s1431 + $0x20] sm:$0x1]
        %v1467 = vld [vmem:[%s1431 + $0x2c] sm:$0x1]
        %v1468 = vld [vmem:[%s1431 + $0x38] sm:$0x1]
        %v1469 = vld [vmem:[%s1431 + $0x44] sm:$0x1]
        %v1470 = vld [vmem:[%s1431 + $0x50] sm:$0x1]
        %v1471 = vld [vmem:[%s1431 + $0x5c] sm:$0x1]
        %v1472 = vld [vmem:[%s1431 + $0x68] sm:$0x1]
        %v1473 = vld [vmem:[%s1431 + $0x74] sm:$0x1]
        %v1474 = vld [vmem:[%s1431 + $0x80] sm:$0x1]
        %v1475 = vld [vmem:[%s1431 + $0x8c] sm:$0x1]
        %v1476 = vld [vmem:[%s1431 + $0x98] sm:$0x1]
        %v1477 = vld [vmem:[%s1431 + $0xa4] sm:$0x1]
        %v1478 = vld [vmem:[%s1431 + $0xb0] sm:$0x1]
        %v1479 = vld [vmem:[%s1431 + $0xbc] sm:$0x1]
        %v1481 = vshrl.u32 %v1432, 16
        %v1483 = vrot.slane %v1481, 4
        %v1484 = vshll.u32 %v1432, 16
        %v1486 = vrot.slane %v1484, 5
        %v1487 = vor.u32 %v1483, %v1486
        %v1488 = vrot.slane %v1487, 4
        %v1490 = vshll.u32 %v1433, 16
        %v1492 = vrot.slane %v1490, 5
        %v1493 = vsel %vm252, %v1488, %v1492
        %v1494 = vshrl.u32 %v1433, 16
        %v1496 = vrot.slane %v1494, 4
        %v1497 = vor.u32 %v1496, %v1492
        %v1498 = vrot.slane %v1497, 4
        %v1500 = vshll.u32 %v1464, 16
        %v1502 = vrot.slane %v1500, 5
        %v1503 = vsel %vm252, %v1498, %v1502
        %v1505 = vshrl.u32 %v1434, 16
        %v1507 = vrot.slane %v1505, 4
        %v1508 = vshll.u32 %v1434, 16
        %v1510 = vrot.slane %v1508, 5
        %v1511 = vor.u32 %v1507, %v1510
        %v1512 = vrot.slane %v1511, 4
        %v1514 = vshll.u32 %v1435, 16
        %v1516 = vrot.slane %v1514, 5
        %v1517 = vsel %vm252, %v1512, %v1516
        %v1518 = vshrl.u32 %v1435, 16
        %v1520 = vrot.slane %v1518, 4
        %v1521 = vor.u32 %v1520, %v1516
        %v1522 = vrot.slane %v1521, 4
        %v1524 = vshll.u32 %v1465, 16
        %v1526 = vrot.slane %v1524, 5
        %v1527 = vsel %vm252, %v1522, %v1526
        %v1529 = vshrl.u32 %v1436, 16
        %v1531 = vrot.slane %v1529, 4
        %v1532 = vshll.u32 %v1436, 16
        %v1534 = vrot.slane %v1532, 5
        %v1535 = vor.u32 %v1531, %v1534
        %v1536 = vrot.slane %v1535, 4
        %v1538 = vshll.u32 %v1437, 16
        %v1540 = vrot.slane %v1538, 5
        %v1541 = vsel %vm252, %v1536, %v1540
        %v1542 = vshrl.u32 %v1437, 16
        %v1544 = vrot.slane %v1542, 4
        %v1545 = vor.u32 %v1544, %v1540
        %v1546 = vrot.slane %v1545, 4
        %v1548 = vshll.u32 %v1466, 16
        %v1550 = vrot.slane %v1548, 5
        %v1551 = vsel %vm252, %v1546, %v1550
        %v1553 = vshrl.u32 %v1438, 16
        %v1555 = vrot.slane %v1553, 4
        %v1556 = vshll.u32 %v1438, 16
        %v1558 = vrot.slane %v1556, 5
        %v1559 = vor.u32 %v1555, %v1558
        %v1560 = vrot.slane %v1559, 4
        %v1562 = vshll.u32 %v1439, 16
        %v1564 = vrot.slane %v1562, 5
        %v1565 = vsel %vm252, %v1560, %v1564
        %v1566 = vshrl.u32 %v1439, 16
        %v1568 = vrot.slane %v1566, 4
        %v1569 = vor.u32 %v1568, %v1564
        %v1570 = vrot.slane %v1569, 4
        %v1572 = vshll.u32 %v1467, 16
        %v1574 = vrot.slane %v1572, 5
        %v1575 = vsel %vm252, %v1570, %v1574
        %v1577 = vshrl.u32 %v1440, 16
        %v1579 = vrot.slane %v1577, 4
        %v1580 = vshll.u32 %v1440, 16
        %v1582 = vrot.slane %v1580, 5
        %v1583 = vor.u32 %v1579, %v1582
        %v1584 = vrot.slane %v1583, 4
        %v1586 = vshll.u32 %v1441, 16
        %v1588 = vrot.slane %v1586, 5
        %v1589 = vsel %vm252, %v1584, %v1588
        %v1590 = vshrl.u32 %v1441, 16
        %v1592 = vrot.slane %v1590, 4
        %v1593 = vor.u32 %v1592, %v1588
        %v1594 = vrot.slane %v1593, 4
        %v1596 = vshll.u32 %v1468, 16
        %v1598 = vrot.slane %v1596, 5
        %v1599 = vsel %vm252, %v1594, %v1598
        %v1601 = vshrl.u32 %v1442, 16
        %v1603 = vrot.slane %v1601, 4
        %v1604 = vshll.u32 %v1442, 16
        %v1606 = vrot.slane %v1604, 5
        %v1607 = vor.u32 %v1603, %v1606
        %v1608 = vrot.slane %v1607, 4
        %v1610 = vshll.u32 %v1443, 16
        %v1612 = vrot.slane %v1610, 5
        %v1613 = vsel %vm252, %v1608, %v1612
        %v1614 = vshrl.u32 %v1443, 16
        %v1616 = vrot.slane %v1614, 4
        %v1617 = vor.u32 %v1616, %v1612
        %v1618 = vrot.slane %v1617, 4
        %v1620 = vshll.u32 %v1469, 16
        %v1622 = vrot.slane %v1620, 5
        %v1623 = vsel %vm252, %v1618, %v1622
        %v1625 = vshrl.u32 %v1444, 16
        %v1627 = vrot.slane %v1625, 4
        %v1628 = vshll.u32 %v1444, 16
        %v1630 = vrot.slane %v1628, 5
        %v1631 = vor.u32 %v1627, %v1630
        %v1632 = vrot.slane %v1631, 4
        %v1634 = vshll.u32 %v1445, 16
        %v1636 = vrot.slane %v1634, 5
        %v1637 = vsel %vm252, %v1632, %v1636
        %v1638 = vshrl.u32 %v1445, 16
        %v1640 = vrot.slane %v1638, 4
        %v1641 = vor.u32 %v1640, %v1636
        %v1642 = vrot.slane %v1641, 4
        %v1644 = vshll.u32 %v1470, 16
        %v1646 = vrot.slane %v1644, 5
        %v1647 = vsel %vm252, %v1642, %v1646
        %v1649 = vshrl.u32 %v1446, 16
        %v1651 = vrot.slane %v1649, 4
        %v1652 = vshll.u32 %v1446, 16
        %v1654 = vrot.slane %v1652, 5
        %v1655 = vor.u32 %v1651, %v1654
        %v1656 = vrot.slane %v1655, 4
        %v1658 = vshll.u32 %v1447, 16
        %v1660 = vrot.slane %v1658, 5
        %v1661 = vsel %vm252, %v1656, %v1660
        %v1662 = vshrl.u32 %v1447, 16
        %v1664 = vrot.slane %v1662, 4
        %v1665 = vor.u32 %v1664, %v1660
        %v1666 = vrot.slane %v1665, 4
        %v1668 = vshll.u32 %v1471, 16
        %v1670 = vrot.slane %v1668, 5
        %v1671 = vsel %vm252, %v1666, %v1670
        %v1673 = vshrl.u32 %v1448, 16
        %v1675 = vrot.slane %v1673, 4
        %v1676 = vshll.u32 %v1448, 16
        %v1678 = vrot.slane %v1676, 5
        %v1679 = vor.u32 %v1675, %v1678
        %v1680 = vrot.slane %v1679, 4
        %v1682 = vshll.u32 %v1449, 16
        %v1684 = vrot.slane %v1682, 5
        %v1685 = vsel %vm252, %v1680, %v1684
        %v1686 = vshrl.u32 %v1449, 16
        %v1688 = vrot.slane %v1686, 4
        %v1689 = vor.u32 %v1688, %v1684
        %v1690 = vrot.slane %v1689, 4
        %v1692 = vshll.u32 %v1472, 16
        %v1694 = vrot.slane %v1692, 5
        %v1695 = vsel %vm252, %v1690, %v1694
        %v1697 = vshrl.u32 %v1450, 16
        %v1699 = vrot.slane %v1697, 4
        %v1700 = vshll.u32 %v1450, 16
        %v1702 = vrot.slane %v1700, 5
        %v1703 = vor.u32 %v1699, %v1702
        %v1704 = vrot.slane %v1703, 4
        %v1706 = vshll.u32 %v1451, 16
        %v1708 = vrot.slane %v1706, 5
        %v1709 = vsel %vm252, %v1704, %v1708
        %v1710 = vshrl.u32 %v1451, 16
        %v1712 = vrot.slane %v1710, 4
        %v1713 = vor.u32 %v1712, %v1708
        %v1714 = vrot.slane %v1713, 4
        %v1716 = vshll.u32 %v1473, 16
        %v1718 = vrot.slane %v1716, 5
        %v1719 = vsel %vm252, %v1714, %v1718
        %v1721 = vshrl.u32 %v1452, 16
        %v1723 = vrot.slane %v1721, 4
        %v1724 = vshll.u32 %v1452, 16
        %v1726 = vrot.slane %v1724, 5
        %v1727 = vor.u32 %v1723, %v1726
        %v1728 = vrot.slane %v1727, 4
        %v1730 = vshll.u32 %v1453, 16
        %v1732 = vrot.slane %v1730, 5
        %v1733 = vsel %vm252, %v1728, %v1732
        %v1734 = vshrl.u32 %v1453, 16
        %v1736 = vrot.slane %v1734, 4
        %v1737 = vor.u32 %v1736, %v1732
        %v1738 = vrot.slane %v1737, 4
        %v1740 = vshll.u32 %v1474, 16
        %v1742 = vrot.slane %v1740, 5
        %v1743 = vsel %vm252, %v1738, %v1742
        %v1745 = vshrl.u32 %v1454, 16
        %v1747 = vrot.slane %v1745, 4
        %v1748 = vshll.u32 %v1454, 16
        %v1750 = vrot.slane %v1748, 5
        %v1751 = vor.u32 %v1747, %v1750
        %v1752 = vrot.slane %v1751, 4
        %v1754 = vshll.u32 %v1455, 16
        %v1756 = vrot.slane %v1754, 5
        %v1757 = vsel %vm252, %v1752, %v1756
        %v1758 = vshrl.u32 %v1455, 16
        %v1760 = vrot.slane %v1758, 4
        %v1761 = vor.u32 %v1760, %v1756
        %v1762 = vrot.slane %v1761, 4
        %v1764 = vshll.u32 %v1475, 16
        %v1766 = vrot.slane %v1764, 5
        %v1767 = vsel %vm252, %v1762, %v1766
        %v1769 = vshrl.u32 %v1456, 16
        %v1771 = vrot.slane %v1769, 4
        %v1772 = vshll.u32 %v1456, 16
        %v1774 = vrot.slane %v1772, 5
        %v1775 = vor.u32 %v1771, %v1774
        %v1776 = vrot.slane %v1775, 4
        %v1778 = vshll.u32 %v1457, 16
        %v1780 = vrot.slane %v1778, 5
        %v1781 = vsel %vm252, %v1776, %v1780
        %v1782 = vshrl.u32 %v1457, 16
        %v1784 = vrot.slane %v1782, 4
        %v1785 = vor.u32 %v1784, %v1780
        %v1786 = vrot.slane %v1785, 4
        %v1788 = vshll.u32 %v1476, 16
        %v1790 = vrot.slane %v1788, 5
        %v1791 = vsel %vm252, %v1786, %v1790
        %v1793 = vshrl.u32 %v1458, 16
        %v1795 = vrot.slane %v1793, 4
        %v1796 = vshll.u32 %v1458, 16
        %v1798 = vrot.slane %v1796, 5
        %v1799 = vor.u32 %v1795, %v1798
        %v1800 = vrot.slane %v1799, 4
        %v1802 = vshll.u32 %v1459, 16
        %v1804 = vrot.slane %v1802, 5
        %v1805 = vsel %vm252, %v1800, %v1804
        %v1806 = vshrl.u32 %v1459, 16
        %v1808 = vrot.slane %v1806, 4
        %v1809 = vor.u32 %v1808, %v1804
        %v1810 = vrot.slane %v1809, 4
        %v1812 = vshll.u32 %v1477, 16
        %v1814 = vrot.slane %v1812, 5
        %v1815 = vsel %vm252, %v1810, %v1814
        %v1817 = vshrl.u32 %v1460, 16
        %v1819 = vrot.slane %v1817, 4
        %v1820 = vshll.u32 %v1460, 16
        %v1822 = vrot.slane %v1820, 5
        %v1823 = vor.u32 %v1819, %v1822
        %v1824 = vrot.slane %v1823, 4
        %v1826 = vshll.u32 %v1461, 16
        %v1828 = vrot.slane %v1826, 5
        %v1829 = vsel %vm252, %v1824, %v1828
        %v1830 = vshrl.u32 %v1461, 16
        %v1832 = vrot.slane %v1830, 4
        %v1833 = vor.u32 %v1832, %v1828
        %v1834 = vrot.slane %v1833, 4
        %v1836 = vshll.u32 %v1478, 16
        %v1838 = vrot.slane %v1836, 5
        %v1839 = vsel %vm252, %v1834, %v1838
        %v1841 = vshrl.u32 %v1462, 16
        %v1843 = vrot.slane %v1841, 4
        %v1844 = vshll.u32 %v1462, 16
        %v1846 = vrot.slane %v1844, 5
        %v1847 = vor.u32 %v1843, %v1846
        %v1848 = vrot.slane %v1847, 4
        %v1850 = vshll.u32 %v1463, 16
        %v1852 = vrot.slane %v1850, 5
        %v1853 = vsel %vm252, %v1848, %v1852
        %v1854 = vshrl.u32 %v1463, 16
        %v1856 = vrot.slane %v1854, 4
        %v1857 = vor.u32 %v1856, %v1852
        %v1858 = vrot.slane %v1857, 4
        %v1860 = vshll.u32 %v1479, 16
        %v1862 = vrot.slane %v1860, 5
        %v1863 = vsel %vm252, %v1858, %v1862
        %v1864 = vld [vmem:[%s1431] sm:$0xe]
        %v1865 = vld [vmem:[%s1431 + $0xc] sm:$0xe]
        %v1866 = vld [vmem:[%s1431 + $0x18] sm:$0xe]
        %v1867 = vld [vmem:[%s1431 + $0x24] sm:$0xe]
        %v1868 = vld [vmem:[%s1431 + $0x30] sm:$0xe]
        %v1869 = vld [vmem:[%s1431 + $0x3c] sm:$0xe]
        %v1870 = vld [vmem:[%s1431 + $0x48] sm:$0xe]
        %v1871 = vld [vmem:[%s1431 + $0x54] sm:$0xe]
        %v1872 = vld [vmem:[%s1431 + $0x60] sm:$0xe]
        %v1873 = vld [vmem:[%s1431 + $0x6c] sm:$0xe]
        %v1874 = vld [vmem:[%s1431 + $0x78] sm:$0xe]
        %v1875 = vld [vmem:[%s1431 + $0x84] sm:$0xe]
        %v1876 = vld [vmem:[%s1431 + $0x90] sm:$0xe]
        %v1877 = vld [vmem:[%s1431 + $0x9c] sm:$0xe]
        %v1878 = vld [vmem:[%s1431 + $0xa8] sm:$0xe]
        %v1879 = vld [vmem:[%s1431 + $0xb4] sm:$0xe]
        %v1928 = vrot.slane %v1864, 5
        %v1929 = vrot.slane %v1928, 4
        %v1930 = vrot.slane %v1433, 5
        %v1931 = vsel %vm703, %v1929, %v1930
        %v1932 = vrot.slane %v1930, 4
        %v1933 = vrot.slane %v1464, 5
        %v1934 = vsel %vm703, %v1932, %v1933
        %v1935 = vrot.slane %v1865, 5
        %v1936 = vrot.slane %v1935, 4
        %v1937 = vrot.slane %v1435, 5
        %v1938 = vsel %vm703, %v1936, %v1937
        %v1939 = vrot.slane %v1937, 4
        %v1940 = vrot.slane %v1465, 5
        %v1941 = vsel %vm703, %v1939, %v1940
        %v1942 = vrot.slane %v1866, 5
        %v1943 = vrot.slane %v1942, 4
        %v1944 = vrot.slane %v1437, 5
        %v1945 = vsel %vm703, %v1943, %v1944
        %v1946 = vrot.slane %v1944, 4
        %v1947 = vrot.slane %v1466, 5
        %v1948 = vsel %vm703, %v1946, %v1947
        %v1949 = vrot.slane %v1867, 5
        %v1950 = vrot.slane %v1949, 4
        %v1951 = vrot.slane %v1439, 5
        %v1952 = vsel %vm703, %v1950, %v1951
        %v1953 = vrot.slane %v1951, 4
        %v1954 = vrot.slane %v1467, 5
        %v1955 = vsel %vm703, %v1953, %v1954
        %v1956 = vrot.slane %v1868, 5
        %v1957 = vrot.slane %v1956, 4
        %v1958 = vrot.slane %v1441, 5
        %v1959 = vsel %vm703, %v1957, %v1958
        %v1960 = vrot.slane %v1958, 4
        %v1961 = vrot.slane %v1468, 5
        %v1962 = vsel %vm703, %v1960, %v1961
        %v1963 = vrot.slane %v1869, 5
        %v1964 = vrot.slane %v1963, 4
        %v1965 = vrot.slane %v1443, 5
        %v1966 = vsel %vm703, %v1964, %v1965
        %v1967 = vrot.slane %v1965, 4
        %v1968 = vrot.slane %v1469, 5
        %v1969 = vsel %vm703, %v1967, %v1968
        %v1970 = vrot.slane %v1870, 5
        %v1971 = vrot.slane %v1970, 4
        %v1972 = vrot.slane %v1445, 5
        %v1973 = vsel %vm703, %v1971, %v1972
        %v1974 = vrot.slane %v1972, 4
        %v1975 = vrot.slane %v1470, 5
        %v1976 = vsel %vm703, %v1974, %v1975
        %v1977 = vrot.slane %v1871, 5
        %v1978 = vrot.slane %v1977, 4
        %v1979 = vrot.slane %v1447, 5
        %v1980 = vsel %vm703, %v1978, %v1979
        %v1981 = vrot.slane %v1979, 4
        %v1982 = vrot.slane %v1471, 5
        %v1983 = vsel %vm703, %v1981, %v1982
        %v1984 = vrot.slane %v1872, 5
        %v1985 = vrot.slane %v1984, 4
        %v1986 = vrot.slane %v1449, 5
        %v1987 = vsel %vm703, %v1985, %v1986
        %v1988 = vrot.slane %v1986, 4
        %v1989 = vrot.slane %v1472, 5
        %v1990 = vsel %vm703, %v1988, %v1989
        %v1991 = vrot.slane %v1873, 5
        %v1992 = vrot.slane %v1991, 4
        %v1993 = vrot.slane %v1451, 5
        %v1994 = vsel %vm703, %v1992, %v1993
        %v1995 = vrot.slane %v1993, 4
        %v1996 = vrot.slane %v1473, 5
        %v1997 = vsel %vm703, %v1995, %v1996
        %v1998 = vrot.slane %v1874, 5
        %v1999 = vrot.slane %v1998, 4
        %v2000 = vrot.slane %v1453, 5
        %v2001 = vsel %vm703, %v1999, %v2000
        %v2002 = vrot.slane %v2000, 4
        %v2003 = vrot.slane %v1474, 5
        %v2004 = vsel %vm703, %v2002, %v2003
        %v2005 = vrot.slane %v1875, 5
        %v2006 = vrot.slane %v2005, 4
        %v2007 = vrot.slane %v1455, 5
        %v2008 = vsel %vm703, %v2006, %v2007
        %v2009 = vrot.slane %v2007, 4
        %v2010 = vrot.slane %v1475, 5
        %v2011 = vsel %vm703, %v2009, %v2010
        %v2012 = vrot.slane %v1876, 5
        %v2013 = vrot.slane %v2012, 4
        %v2014 = vrot.slane %v1457, 5
        %v2015 = vsel %vm703, %v2013, %v2014
        %v2016 = vrot.slane %v2014, 4
        %v2017 = vrot.slane %v1476, 5
        %v2018 = vsel %vm703, %v2016, %v2017
        %v2019 = vrot.slane %v1877, 5
        %v2020 = vrot.slane %v2019, 4
        %v2021 = vrot.slane %v1459, 5
        %v2022 = vsel %vm703, %v2020, %v2021
        %v2023 = vrot.slane %v2021, 4
        %v2024 = vrot.slane %v1477, 5
        %v2025 = vsel %vm703, %v2023, %v2024
        %v2026 = vrot.slane %v1878, 5
        %v2027 = vrot.slane %v2026, 4
        %v2028 = vrot.slane %v1461, 5
        %v2029 = vsel %vm703, %v2027, %v2028
        %v2030 = vrot.slane %v2028, 4
        %v2031 = vrot.slane %v1478, 5
        %v2032 = vsel %vm703, %v2030, %v2031
        %v2033 = vrot.slane %v1879, 5
        %v2034 = vrot.slane %v2033, 4
        %v2035 = vrot.slane %v1463, 5
        %v2036 = vsel %vm703, %v2034, %v2035
        %v2037 = vrot.slane %v2035, 4
        %v2038 = vrot.slane %v1479, 5
        %v2039 = vsel %vm703, %v2037, %v2038
        %v2056 = vunpack.c.l.b16 %v202
        %v2057 = vunpack.c.l.b16 %v203
        %v2058 = vunpack.c.l.b16 %v204
        %v2059 = vunpack.c.l.b16 %v205
        %v2060 = vunpack.c.l.b16 %v206
        %v2061 = vunpack.c.l.b16 %v207
        %v2062 = vunpack.c.l.b16 %v208
        %v2063 = vunpack.c.l.b16 %v209
        %v2064 = vunpack.c.l.b16 %v210
        %v2065 = vunpack.c.l.b16 %v211
        %v2066 = vunpack.c.l.b16 %v212
        %v2067 = vunpack.c.l.b16 %v213
        %v2068 = vunpack.c.l.b16 %v214
        %v2069 = vunpack.c.l.b16 %v215
        %v2070 = vunpack.c.l.b16 %v216
        %v2071 = vunpack.c.l.b16 %v217
        %v2072 = vunpack.c.l.b16 %v218
        %v2073 = vunpack.c.l.b16 %v219
        %v2074 = vunpack.c.l.b16 %v220
        %v2075 = vunpack.c.l.b16 %v221
        %v2076 = vunpack.c.l.b16 %v222
        %v2077 = vunpack.c.l.b16 %v223
        %v2078 = vunpack.c.l.b16 %v224
        %v2079 = vunpack.c.l.b16 %v225
        %v2080 = vunpack.c.l.b16 %v226
        %v2081 = vunpack.c.l.b16 %v227
        %v2082 = vunpack.c.l.b16 %v228
        %v2083 = vunpack.c.l.b16 %v229
        %v2084 = vunpack.c.l.b16 %v230
        %v2085 = vunpack.c.l.b16 %v231
        %v2086 = vunpack.c.l.b16 %v232
        %v2087 = vunpack.c.l.b16 %v233
        %v2088 = vpack.c.b16 %v2057, %v2056
        %v2089 = vpack.c.b16 %v2059, %v2058
        %v2090 = vpack.c.b16 %v2061, %v2060
        %v2091 = vpack.c.b16 %v2063, %v2062
        %v2092 = vpack.c.b16 %v2065, %v2064
        %v2093 = vpack.c.b16 %v2067, %v2066
        %v2094 = vpack.c.b16 %v2069, %v2068
        %v2095 = vpack.c.b16 %v2071, %v2070
        %v2096 = vpack.c.b16 %v2073, %v2072
        %v2097 = vpack.c.b16 %v2075, %v2074
        %v2098 = vpack.c.b16 %v2077, %v2076
        %v2099 = vpack.c.b16 %v2079, %v2078
        %v2100 = vpack.c.b16 %v2081, %v2080
        %v2101 = vpack.c.b16 %v2083, %v2082
        %v2102 = vpack.c.b16 %v2085, %v2084
        %v2103 = vpack.c.b16 %v2087, %v2086
        %v2104 = vunpack.c.l.b16 %v266
        %v2105 = vunpack.c.l.b16 %v276
        %v2106 = vunpack.c.l.b16 %v290
        %v2107 = vunpack.c.l.b16 %v300
        %v2108 = vunpack.c.l.b16 %v314
        %v2109 = vunpack.c.l.b16 %v324
        %v2110 = vunpack.c.l.b16 %v338
        %v2111 = vunpack.c.l.b16 %v348
        %v2112 = vunpack.c.l.b16 %v362
        %v2113 = vunpack.c.l.b16 %v372
        %v2114 = vunpack.c.l.b16 %v386
        %v2115 = vunpack.c.l.b16 %v396
        %v2116 = vunpack.c.l.b16 %v410
        %v2117 = vunpack.c.l.b16 %v420
        %v2118 = vunpack.c.l.b16 %v434
        %v2119 = vunpack.c.l.b16 %v444
        %v2120 = vunpack.c.l.b16 %v458
        %v2121 = vunpack.c.l.b16 %v468
        %v2122 = vunpack.c.l.b16 %v482
        %v2123 = vunpack.c.l.b16 %v492
        %v2124 = vunpack.c.l.b16 %v506
        %v2125 = vunpack.c.l.b16 %v516
        %v2126 = vunpack.c.l.b16 %v530
        %v2127 = vunpack.c.l.b16 %v540
        %v2128 = vunpack.c.l.b16 %v554
        %v2129 = vunpack.c.l.b16 %v564
        %v2130 = vunpack.c.l.b16 %v578
        %v2131 = vunpack.c.l.b16 %v588
        %v2132 = vunpack.c.l.b16 %v602
        %v2133 = vunpack.c.l.b16 %v612
        %v2134 = vunpack.c.l.b16 %v626
        %v2135 = vunpack.c.l.b16 %v636
        %v2136 = vpack.c.b16 %v2105, %v2104
        %v2137 = vpack.c.b16 %v2107, %v2106
        %v2138 = vpack.c.b16 %v2109, %v2108
        %v2139 = vpack.c.b16 %v2111, %v2110
        %v2140 = vpack.c.b16 %v2113, %v2112
        %v2141 = vpack.c.b16 %v2115, %v2114
        %v2142 = vpack.c.b16 %v2117, %v2116
        %v2143 = vpack.c.b16 %v2119, %v2118
        %v2144 = vpack.c.b16 %v2121, %v2120
        %v2145 = vpack.c.b16 %v2123, %v2122
        %v2146 = vpack.c.b16 %v2125, %v2124
        %v2147 = vpack.c.b16 %v2127, %v2126
        %v2148 = vpack.c.b16 %v2129, %v2128
        %v2149 = vpack.c.b16 %v2131, %v2130
        %v2150 = vpack.c.b16 %v2133, %v2132
        %v2151 = vpack.c.b16 %v2135, %v2134
        %2152 = vrot.lane.b32.xlu0 %v2136, 16
        %v2153 = vpop.permute.xlu0 %2152
        %2154 = vrot.lane.b32.xlu0 %v2137, 16
        %v2155 = vpop.permute.xlu0 %2154
        %2156 = vrot.lane.b32.xlu0 %v2138, 16
        %v2157 = vpop.permute.xlu0 %2156
        %2158 = vrot.lane.b32.xlu0 %v2139, 16
        %v2159 = vpop.permute.xlu0 %2158
        %2160 = vrot.lane.b32.xlu0 %v2140, 16
        %v2161 = vpop.permute.xlu0 %2160
        %2162 = vrot.lane.b32.xlu0 %v2141, 16
        %v2163 = vpop.permute.xlu0 %2162
        %2164 = vrot.lane.b32.xlu0 %v2142, 16
        %v2165 = vpop.permute.xlu0 %2164
        %2166 = vrot.lane.b32.xlu0 %v2143, 16
        %v2167 = vpop.permute.xlu0 %2166
        %2168 = vrot.lane.b32.xlu0 %v2144, 16
        %v2169 = vpop.permute.xlu0 %2168
        %2170 = vrot.lane.b32.xlu0 %v2145, 16
        %v2171 = vpop.permute.xlu0 %2170
        %2172 = vrot.lane.b32.xlu0 %v2146, 16
        %v2173 = vpop.permute.xlu0 %2172
        %2174 = vrot.lane.b32.xlu0 %v2147, 16
        %v2175 = vpop.permute.xlu0 %2174
        %2176 = vrot.lane.b32.xlu0 %v2148, 16
        %v2177 = vpop.permute.xlu0 %2176
        %2178 = vrot.lane.b32.xlu0 %v2149, 16
        %v2179 = vpop.permute.xlu0 %2178
        %2180 = vrot.lane.b32.xlu0 %v2150, 16
        %v2181 = vpop.permute.xlu0 %2180
        %2182 = vrot.lane.b32.xlu0 %v2151, 16
        %v2183 = vpop.permute.xlu0 %2182
        %v2184 = vunpack.c.l.b16 %v707
        %v2185 = vunpack.c.l.b16 %v710
        %v2186 = vunpack.c.l.b16 %v714
        %v2187 = vunpack.c.l.b16 %v717
        %v2188 = vunpack.c.l.b16 %v721
        %v2189 = vunpack.c.l.b16 %v724
        %v2190 = vunpack.c.l.b16 %v728
        %v2191 = vunpack.c.l.b16 %v731
        %v2192 = vunpack.c.l.b16 %v735
        %v2193 = vunpack.c.l.b16 %v738
        %v2194 = vunpack.c.l.b16 %v742
        %v2195 = vunpack.c.l.b16 %v745
        %v2196 = vunpack.c.l.b16 %v749
        %v2197 = vunpack.c.l.b16 %v752
        %v2198 = vunpack.c.l.b16 %v756
        %v2199 = vunpack.c.l.b16 %v759
        %v2200 = vunpack.c.l.b16 %v763
        %v2201 = vunpack.c.l.b16 %v766
        %v2202 = vunpack.c.l.b16 %v770
        %v2203 = vunpack.c.l.b16 %v773
        %v2204 = vunpack.c.l.b16 %v777
        %v2205 = vunpack.c.l.b16 %v780
        %v2206 = vunpack.c.l.b16 %v784
        %v2207 = vunpack.c.l.b16 %v787
        %v2208 = vunpack.c.l.b16 %v791
        %v2209 = vunpack.c.l.b16 %v794
        %v2210 = vunpack.c.l.b16 %v798
        %v2211 = vunpack.c.l.b16 %v801
        %v2212 = vunpack.c.l.b16 %v805
        %v2213 = vunpack.c.l.b16 %v808
        %v2214 = vunpack.c.l.b16 %v812
        %v2215 = vunpack.c.l.b16 %v815
        %v2216 = vpack.c.b16 %v2185, %v2184
        %v2217 = vpack.c.b16 %v2187, %v2186
        %v2218 = vpack.c.b16 %v2189, %v2188
        %v2219 = vpack.c.b16 %v2191, %v2190
        %v2220 = vpack.c.b16 %v2193, %v2192
        %v2221 = vpack.c.b16 %v2195, %v2194
        %v2222 = vpack.c.b16 %v2197, %v2196
        %v2223 = vpack.c.b16 %v2199, %v2198
        %v2224 = vpack.c.b16 %v2201, %v2200
        %v2225 = vpack.c.b16 %v2203, %v2202
        %v2226 = vpack.c.b16 %v2205, %v2204
        %v2227 = vpack.c.b16 %v2207, %v2206
        %v2228 = vpack.c.b16 %v2209, %v2208
        %v2229 = vpack.c.b16 %v2211, %v2210
        %v2230 = vpack.c.b16 %v2213, %v2212
        %v2231 = vpack.c.b16 %v2215, %v2214
        %2232 = vrot.lane.b32.xlu0 %v2216, 32
        %v2233 = vpop.permute.xlu0 %2232
        %2234 = vrot.lane.b32.xlu0 %v2217, 32
        %v2235 = vpop.permute.xlu0 %2234
        %2236 = vrot.lane.b32.xlu0 %v2218, 32
        %v2237 = vpop.permute.xlu0 %2236
        %2238 = vrot.lane.b32.xlu0 %v2219, 32
        %v2239 = vpop.permute.xlu0 %2238
        %2240 = vrot.lane.b32.xlu0 %v2220, 32
        %v2241 = vpop.permute.xlu0 %2240
        %2242 = vrot.lane.b32.xlu0 %v2221, 32
        %v2243 = vpop.permute.xlu0 %2242
        %2244 = vrot.lane.b32.xlu0 %v2222, 32
        %v2245 = vpop.permute.xlu0 %2244
        %2246 = vrot.lane.b32.xlu0 %v2223, 32
        %v2247 = vpop.permute.xlu0 %2246
        %2248 = vrot.lane.b32.xlu0 %v2224, 32
        %v2249 = vpop.permute.xlu0 %2248
        %2250 = vrot.lane.b32.xlu0 %v2225, 32
        %v2251 = vpop.permute.xlu0 %2250
        %2252 = vrot.lane.b32.xlu0 %v2226, 32
        %v2253 = vpop.permute.xlu0 %2252
        %2254 = vrot.lane.b32.xlu0 %v2227, 32
        %v2255 = vpop.permute.xlu0 %2254
        %2256 = vrot.lane.b32.xlu0 %v2228, 32
        %v2257 = vpop.permute.xlu0 %2256
        %2258 = vrot.lane.b32.xlu0 %v2229, 32
        %v2259 = vpop.permute.xlu0 %2258
        %2260 = vrot.lane.b32.xlu0 %v2230, 32
        %v2261 = vpop.permute.xlu0 %2260
        %2262 = vrot.lane.b32.xlu0 %v2231, 32
        %v2263 = vpop.permute.xlu0 %2262
        %v2280 = vunpack.c.l.b16 %v820
        %v2281 = vunpack.c.l.b16 %v821
        %v2282 = vunpack.c.l.b16 %v822
        %v2283 = vunpack.c.l.b16 %v823
        %v2284 = vunpack.c.l.b16 %v824
        %v2285 = vunpack.c.l.b16 %v825
        %v2286 = vunpack.c.l.b16 %v826
        %v2287 = vunpack.c.l.b16 %v827
        %v2288 = vunpack.c.l.b16 %v828
        %v2289 = vunpack.c.l.b16 %v829
        %v2290 = vunpack.c.l.b16 %v830
        %v2291 = vunpack.c.l.b16 %v831
        %v2292 = vunpack.c.l.b16 %v832
        %v2293 = vunpack.c.l.b16 %v833
        %v2294 = vunpack.c.l.b16 %v834
        %v2295 = vunpack.c.l.b16 %v835
        %v2296 = vunpack.c.l.b16 %v836
        %v2297 = vunpack.c.l.b16 %v837
        %v2298 = vunpack.c.l.b16 %v838
        %v2299 = vunpack.c.l.b16 %v839
        %v2300 = vunpack.c.l.b16 %v840
        %v2301 = vunpack.c.l.b16 %v841
        %v2302 = vunpack.c.l.b16 %v842
        %v2303 = vunpack.c.l.b16 %v843
        %v2304 = vunpack.c.l.b16 %v844
        %v2305 = vunpack.c.l.b16 %v845
        %v2306 = vunpack.c.l.b16 %v846
        %v2307 = vunpack.c.l.b16 %v847
        %v2308 = vunpack.c.l.b16 %v848
        %v2309 = vunpack.c.l.b16 %v849
        %v2310 = vunpack.c.l.b16 %v850
        %v2311 = vunpack.c.l.b16 %v851
        %v2312 = vpack.c.b16 %v2281, %v2280
        %v2313 = vpack.c.b16 %v2283, %v2282
        %v2314 = vpack.c.b16 %v2285, %v2284
        %v2315 = vpack.c.b16 %v2287, %v2286
        %v2316 = vpack.c.b16 %v2289, %v2288
        %v2317 = vpack.c.b16 %v2291, %v2290
        %v2318 = vpack.c.b16 %v2293, %v2292
        %v2319 = vpack.c.b16 %v2295, %v2294
        %v2320 = vpack.c.b16 %v2297, %v2296
        %v2321 = vpack.c.b16 %v2299, %v2298
        %v2322 = vpack.c.b16 %v2301, %v2300
        %v2323 = vpack.c.b16 %v2303, %v2302
        %v2324 = vpack.c.b16 %v2305, %v2304
        %v2325 = vpack.c.b16 %v2307, %v2306
        %v2326 = vpack.c.b16 %v2309, %v2308
        %v2327 = vpack.c.b16 %v2311, %v2310
        %2328 = vrot.lane.b32.xlu0 %v2312, 48
        %v2329 = vpop.permute.xlu0 %2328
        %2330 = vrot.lane.b32.xlu0 %v2313, 48
        %v2331 = vpop.permute.xlu0 %2330
        %2332 = vrot.lane.b32.xlu0 %v2314, 48
        %v2333 = vpop.permute.xlu0 %2332
        %2334 = vrot.lane.b32.xlu0 %v2315, 48
        %v2335 = vpop.permute.xlu0 %2334
        %2336 = vrot.lane.b32.xlu0 %v2316, 48
        %v2337 = vpop.permute.xlu0 %2336
        %2338 = vrot.lane.b32.xlu0 %v2317, 48
        %v2339 = vpop.permute.xlu0 %2338
        %2340 = vrot.lane.b32.xlu0 %v2318, 48
        %v2341 = vpop.permute.xlu0 %2340
        %2342 = vrot.lane.b32.xlu0 %v2319, 48
        %v2343 = vpop.permute.xlu0 %2342
        %2344 = vrot.lane.b32.xlu0 %v2320, 48
        %v2345 = vpop.permute.xlu0 %2344
        %2346 = vrot.lane.b32.xlu0 %v2321, 48
        %v2347 = vpop.permute.xlu0 %2346
        %2348 = vrot.lane.b32.xlu0 %v2322, 48
        %v2349 = vpop.permute.xlu0 %2348
        %2350 = vrot.lane.b32.xlu0 %v2323, 48
        %v2351 = vpop.permute.xlu0 %2350
        %2352 = vrot.lane.b32.xlu0 %v2324, 48
        %v2353 = vpop.permute.xlu0 %2352
        %2354 = vrot.lane.b32.xlu0 %v2325, 48
        %v2355 = vpop.permute.xlu0 %2354
        %2356 = vrot.lane.b32.xlu0 %v2326, 48
        %v2357 = vpop.permute.xlu0 %2356
        %2358 = vrot.lane.b32.xlu0 %v2327, 48
        %v2359 = vpop.permute.xlu0 %2358
        %v2360 = vunpack.c.l.b16 %v881
        %v2361 = vunpack.c.l.b16 %v891
        %v2362 = vunpack.c.l.b16 %v905
        %v2363 = vunpack.c.l.b16 %v915
        %v2364 = vunpack.c.l.b16 %v929
        %v2365 = vunpack.c.l.b16 %v939
        %v2366 = vunpack.c.l.b16 %v953
        %v2367 = vunpack.c.l.b16 %v963
        %v2368 = vunpack.c.l.b16 %v977
        %v2369 = vunpack.c.l.b16 %v987
        %v2370 = vunpack.c.l.b16 %v1001
        %v2371 = vunpack.c.l.b16 %v1011
        %v2372 = vunpack.c.l.b16 %v1025
        %v2373 = vunpack.c.l.b16 %v1035
        %v2374 = vunpack.c.l.b16 %v1049
        %v2375 = vunpack.c.l.b16 %v1059
        %v2376 = vunpack.c.l.b16 %v1073
        %v2377 = vunpack.c.l.b16 %v1083
        %v2378 = vunpack.c.l.b16 %v1097
        %v2379 = vunpack.c.l.b16 %v1107
        %v2380 = vunpack.c.l.b16 %v1121
        %v2381 = vunpack.c.l.b16 %v1131
        %v2382 = vunpack.c.l.b16 %v1145
        %v2383 = vunpack.c.l.b16 %v1155
        %v2384 = vunpack.c.l.b16 %v1169
        %v2385 = vunpack.c.l.b16 %v1179
        %v2386 = vunpack.c.l.b16 %v1193
        %v2387 = vunpack.c.l.b16 %v1203
        %v2388 = vunpack.c.l.b16 %v1217
        %v2389 = vunpack.c.l.b16 %v1227
        %v2390 = vunpack.c.l.b16 %v1241
        %v2391 = vunpack.c.l.b16 %v1251
        %v2392 = vpack.c.b16 %v2361, %v2360
        %v2393 = vpack.c.b16 %v2363, %v2362
        %v2394 = vpack.c.b16 %v2365, %v2364
        %v2395 = vpack.c.b16 %v2367, %v2366
        %v2396 = vpack.c.b16 %v2369, %v2368
        %v2397 = vpack.c.b16 %v2371, %v2370
        %v2398 = vpack.c.b16 %v2373, %v2372
        %v2399 = vpack.c.b16 %v2375, %v2374
        %v2400 = vpack.c.b16 %v2377, %v2376
        %v2401 = vpack.c.b16 %v2379, %v2378
        %v2402 = vpack.c.b16 %v2381, %v2380
        %v2403 = vpack.c.b16 %v2383, %v2382
        %v2404 = vpack.c.b16 %v2385, %v2384
        %v2405 = vpack.c.b16 %v2387, %v2386
        %v2406 = vpack.c.b16 %v2389, %v2388
        %v2407 = vpack.c.b16 %v2391, %v2390
        %2408 = vrot.lane.b32.xlu0 %v2392, 64
        %v2409 = vpop.permute.xlu0 %2408
        %2410 = vrot.lane.b32.xlu0 %v2393, 64
        %v2411 = vpop.permute.xlu0 %2410
        %2412 = vrot.lane.b32.xlu0 %v2394, 64
        %v2413 = vpop.permute.xlu0 %2412
        %2414 = vrot.lane.b32.xlu0 %v2395, 64
        %v2415 = vpop.permute.xlu0 %2414
        %2416 = vrot.lane.b32.xlu0 %v2396, 64
        %v2417 = vpop.permute.xlu0 %2416
        %2418 = vrot.lane.b32.xlu0 %v2397, 64
        %v2419 = vpop.permute.xlu0 %2418
        %2420 = vrot.lane.b32.xlu0 %v2398, 64
        %v2421 = vpop.permute.xlu0 %2420
        %2422 = vrot.lane.b32.xlu0 %v2399, 64
        %v2423 = vpop.permute.xlu0 %2422
        %2424 = vrot.lane.b32.xlu0 %v2400, 64
        %v2425 = vpop.permute.xlu0 %2424
        %2426 = vrot.lane.b32.xlu0 %v2401, 64
        %v2427 = vpop.permute.xlu0 %2426
        %2428 = vrot.lane.b32.xlu0 %v2402, 64
        %v2429 = vpop.permute.xlu0 %2428
        %2430 = vrot.lane.b32.xlu0 %v2403, 64
        %v2431 = vpop.permute.xlu0 %2430
        %2432 = vrot.lane.b32.xlu0 %v2404, 64
        %v2433 = vpop.permute.xlu0 %2432
        %2434 = vrot.lane.b32.xlu0 %v2405, 64
        %v2435 = vpop.permute.xlu0 %2434
        %2436 = vrot.lane.b32.xlu0 %v2406, 64
        %v2437 = vpop.permute.xlu0 %2436
        %2438 = vrot.lane.b32.xlu0 %v2407, 64
        %v2439 = vpop.permute.xlu0 %2438
        %v2440 = vunpack.c.l.b16 %v1319
        %v2441 = vunpack.c.l.b16 %v1322
        %v2442 = vunpack.c.l.b16 %v1326
        %v2443 = vunpack.c.l.b16 %v1329
        %v2444 = vunpack.c.l.b16 %v1333
        %v2445 = vunpack.c.l.b16 %v1336
        %v2446 = vunpack.c.l.b16 %v1340
        %v2447 = vunpack.c.l.b16 %v1343
        %v2448 = vunpack.c.l.b16 %v1347
        %v2449 = vunpack.c.l.b16 %v1350
        %v2450 = vunpack.c.l.b16 %v1354
        %v2451 = vunpack.c.l.b16 %v1357
        %v2452 = vunpack.c.l.b16 %v1361
        %v2453 = vunpack.c.l.b16 %v1364
        %v2454 = vunpack.c.l.b16 %v1368
        %v2455 = vunpack.c.l.b16 %v1371
        %v2456 = vunpack.c.l.b16 %v1375
        %v2457 = vunpack.c.l.b16 %v1378
        %v2458 = vunpack.c.l.b16 %v1382
        %v2459 = vunpack.c.l.b16 %v1385
        %v2460 = vunpack.c.l.b16 %v1389
        %v2461 = vunpack.c.l.b16 %v1392
        %v2462 = vunpack.c.l.b16 %v1396
        %v2463 = vunpack.c.l.b16 %v1399
        %v2464 = vunpack.c.l.b16 %v1403
        %v2465 = vunpack.c.l.b16 %v1406
        %v2466 = vunpack.c.l.b16 %v1410
        %v2467 = vunpack.c.l.b16 %v1413
        %v2468 = vunpack.c.l.b16 %v1417
        %v2469 = vunpack.c.l.b16 %v1420
        %v2470 = vunpack.c.l.b16 %v1424
        %v2471 = vunpack.c.l.b16 %v1427
        %v2472 = vpack.c.b16 %v2441, %v2440
        %v2473 = vpack.c.b16 %v2443, %v2442
        %v2474 = vpack.c.b16 %v2445, %v2444
        %v2475 = vpack.c.b16 %v2447, %v2446
        %v2476 = vpack.c.b16 %v2449, %v2448
        %v2477 = vpack.c.b16 %v2451, %v2450
        %v2478 = vpack.c.b16 %v2453, %v2452
        %v2479 = vpack.c.b16 %v2455, %v2454
        %v2480 = vpack.c.b16 %v2457, %v2456
        %v2481 = vpack.c.b16 %v2459, %v2458
        %v2482 = vpack.c.b16 %v2461, %v2460
        %v2483 = vpack.c.b16 %v2463, %v2462
        %v2484 = vpack.c.b16 %v2465, %v2464
        %v2485 = vpack.c.b16 %v2467, %v2466
        %v2486 = vpack.c.b16 %v2469, %v2468
        %v2487 = vpack.c.b16 %v2471, %v2470
        %2488 = vrot.lane.b32.xlu0 %v2472, 80
        %v2489 = vpop.permute.xlu0 %2488
        %2490 = vrot.lane.b32.xlu0 %v2473, 80
        %v2491 = vpop.permute.xlu0 %2490
        %2492 = vrot.lane.b32.xlu0 %v2474, 80
        %v2493 = vpop.permute.xlu0 %2492
        %2494 = vrot.lane.b32.xlu0 %v2475, 80
        %v2495 = vpop.permute.xlu0 %2494
        %2496 = vrot.lane.b32.xlu0 %v2476, 80
        %v2497 = vpop.permute.xlu0 %2496
        %2498 = vrot.lane.b32.xlu0 %v2477, 80
        %v2499 = vpop.permute.xlu0 %2498
        %2500 = vrot.lane.b32.xlu0 %v2478, 80
        %v2501 = vpop.permute.xlu0 %2500
        %2502 = vrot.lane.b32.xlu0 %v2479, 80
        %v2503 = vpop.permute.xlu0 %2502
        %2504 = vrot.lane.b32.xlu0 %v2480, 80
        %v2505 = vpop.permute.xlu0 %2504
        %2506 = vrot.lane.b32.xlu0 %v2481, 80
        %v2507 = vpop.permute.xlu0 %2506
        %2508 = vrot.lane.b32.xlu0 %v2482, 80
        %v2509 = vpop.permute.xlu0 %2508
        %2510 = vrot.lane.b32.xlu0 %v2483, 80
        %v2511 = vpop.permute.xlu0 %2510
        %2512 = vrot.lane.b32.xlu0 %v2484, 80
        %v2513 = vpop.permute.xlu0 %2512
        %2514 = vrot.lane.b32.xlu0 %v2485, 80
        %v2515 = vpop.permute.xlu0 %2514
        %2516 = vrot.lane.b32.xlu0 %v2486, 80
        %v2517 = vpop.permute.xlu0 %2516
        %2518 = vrot.lane.b32.xlu0 %v2487, 80
        %v2519 = vpop.permute.xlu0 %2518
        %v2536 = vunpack.c.l.b16 %v1432
        %v2537 = vunpack.c.l.b16 %v1433
        %v2538 = vunpack.c.l.b16 %v1434
        %v2539 = vunpack.c.l.b16 %v1435
        %v2540 = vunpack.c.l.b16 %v1436
        %v2541 = vunpack.c.l.b16 %v1437
        %v2542 = vunpack.c.l.b16 %v1438
        %v2543 = vunpack.c.l.b16 %v1439
        %v2544 = vunpack.c.l.b16 %v1440
        %v2545 = vunpack.c.l.b16 %v1441
        %v2546 = vunpack.c.l.b16 %v1442
        %v2547 = vunpack.c.l.b16 %v1443
        %v2548 = vunpack.c.l.b16 %v1444
        %v2549 = vunpack.c.l.b16 %v1445
        %v2550 = vunpack.c.l.b16 %v1446
        %v2551 = vunpack.c.l.b16 %v1447
        %v2552 = vunpack.c.l.b16 %v1448
        %v2553 = vunpack.c.l.b16 %v1449
        %v2554 = vunpack.c.l.b16 %v1450
        %v2555 = vunpack.c.l.b16 %v1451
        %v2556 = vunpack.c.l.b16 %v1452
        %v2557 = vunpack.c.l.b16 %v1453
        %v2558 = vunpack.c.l.b16 %v1454
        %v2559 = vunpack.c.l.b16 %v1455
        %v2560 = vunpack.c.l.b16 %v1456
        %v2561 = vunpack.c.l.b16 %v1457
        %v2562 = vunpack.c.l.b16 %v1458
        %v2563 = vunpack.c.l.b16 %v1459
        %v2564 = vunpack.c.l.b16 %v1460
        %v2565 = vunpack.c.l.b16 %v1461
        %v2566 = vunpack.c.l.b16 %v1462
        %v2567 = vunpack.c.l.b16 %v1463
        %v2568 = vpack.c.b16 %v2537, %v2536
        %v2569 = vpack.c.b16 %v2539, %v2538
        %v2570 = vpack.c.b16 %v2541, %v2540
        %v2571 = vpack.c.b16 %v2543, %v2542
        %v2572 = vpack.c.b16 %v2545, %v2544
        %v2573 = vpack.c.b16 %v2547, %v2546
        %v2574 = vpack.c.b16 %v2549, %v2548
        %v2575 = vpack.c.b16 %v2551, %v2550
        %v2576 = vpack.c.b16 %v2553, %v2552
        %v2577 = vpack.c.b16 %v2555, %v2554
        %v2578 = vpack.c.b16 %v2557, %v2556
        %v2579 = vpack.c.b16 %v2559, %v2558
        %v2580 = vpack.c.b16 %v2561, %v2560
        %v2581 = vpack.c.b16 %v2563, %v2562
        %v2582 = vpack.c.b16 %v2565, %v2564
        %v2583 = vpack.c.b16 %v2567, %v2566
        %2584 = vrot.lane.b32.xlu0 %v2568, 96
        %v2585 = vpop.permute.xlu0 %2584
        %2586 = vrot.lane.b32.xlu0 %v2569, 96
        %v2587 = vpop.permute.xlu0 %2586
        %2588 = vrot.lane.b32.xlu0 %v2570, 96
        %v2589 = vpop.permute.xlu0 %2588
        %2590 = vrot.lane.b32.xlu0 %v2571, 96
        %v2591 = vpop.permute.xlu0 %2590
        %2592 = vrot.lane.b32.xlu0 %v2572, 96
        %v2593 = vpop.permute.xlu0 %2592
        %2594 = vrot.lane.b32.xlu0 %v2573, 96
        %v2595 = vpop.permute.xlu0 %2594
        %2596 = vrot.lane.b32.xlu0 %v2574, 96
        %v2597 = vpop.permute.xlu0 %2596
        %2598 = vrot.lane.b32.xlu0 %v2575, 96
        %v2599 = vpop.permute.xlu0 %2598
        %2600 = vrot.lane.b32.xlu0 %v2576, 96
        %v2601 = vpop.permute.xlu0 %2600
        %2602 = vrot.lane.b32.xlu0 %v2577, 96
        %v2603 = vpop.permute.xlu0 %2602
        %2604 = vrot.lane.b32.xlu0 %v2578, 96
        %v2605 = vpop.permute.xlu0 %2604
        %2606 = vrot.lane.b32.xlu0 %v2579, 96
        %v2607 = vpop.permute.xlu0 %2606
        %2608 = vrot.lane.b32.xlu0 %v2580, 96
        %v2609 = vpop.permute.xlu0 %2608
        %2610 = vrot.lane.b32.xlu0 %v2581, 96
        %v2611 = vpop.permute.xlu0 %2610
        %2612 = vrot.lane.b32.xlu0 %v2582, 96
        %v2613 = vpop.permute.xlu0 %2612
        %2614 = vrot.lane.b32.xlu0 %v2583, 96
        %v2615 = vpop.permute.xlu0 %2614
        %v2616 = vunpack.c.l.b16 %v1493
        %v2617 = vunpack.c.l.b16 %v1503
        %v2618 = vunpack.c.l.b16 %v1517
        %v2619 = vunpack.c.l.b16 %v1527
        %v2620 = vunpack.c.l.b16 %v1541
        %v2621 = vunpack.c.l.b16 %v1551
        %v2622 = vunpack.c.l.b16 %v1565
        %v2623 = vunpack.c.l.b16 %v1575
        %v2624 = vunpack.c.l.b16 %v1589
        %v2625 = vunpack.c.l.b16 %v1599
        %v2626 = vunpack.c.l.b16 %v1613
        %v2627 = vunpack.c.l.b16 %v1623
        %v2628 = vunpack.c.l.b16 %v1637
        %v2629 = vunpack.c.l.b16 %v1647
        %v2630 = vunpack.c.l.b16 %v1661
        %v2631 = vunpack.c.l.b16 %v1671
        %v2632 = vunpack.c.l.b16 %v1685
        %v2633 = vunpack.c.l.b16 %v1695
        %v2634 = vunpack.c.l.b16 %v1709
        %v2635 = vunpack.c.l.b16 %v1719
        %v2636 = vunpack.c.l.b16 %v1733
        %v2637 = vunpack.c.l.b16 %v1743
        %v2638 = vunpack.c.l.b16 %v1757
        %v2639 = vunpack.c.l.b16 %v1767
        %v2640 = vunpack.c.l.b16 %v1781
        %v2641 = vunpack.c.l.b16 %v1791
        %v2642 = vunpack.c.l.b16 %v1805
        %v2643 = vunpack.c.l.b16 %v1815
        %v2644 = vunpack.c.l.b16 %v1829
        %v2645 = vunpack.c.l.b16 %v1839
        %v2646 = vunpack.c.l.b16 %v1853
        %v2647 = vunpack.c.l.b16 %v1863
        %v2648 = vpack.c.b16 %v2617, %v2616
        %v2649 = vpack.c.b16 %v2619, %v2618
        %v2650 = vpack.c.b16 %v2621, %v2620
        %v2651 = vpack.c.b16 %v2623, %v2622
        %v2652 = vpack.c.b16 %v2625, %v2624
        %v2653 = vpack.c.b16 %v2627, %v2626
        %v2654 = vpack.c.b16 %v2629, %v2628
        %v2655 = vpack.c.b16 %v2631, %v2630
        %v2656 = vpack.c.b16 %v2633, %v2632
        %v2657 = vpack.c.b16 %v2635, %v2634
        %v2658 = vpack.c.b16 %v2637, %v2636
        %v2659 = vpack.c.b16 %v2639, %v2638
        %v2660 = vpack.c.b16 %v2641, %v2640
        %v2661 = vpack.c.b16 %v2643, %v2642
        %v2662 = vpack.c.b16 %v2645, %v2644
        %v2663 = vpack.c.b16 %v2647, %v2646
        %2664 = vrot.lane.b32.xlu0 %v2648, 112
        %v2665 = vpop.permute.xlu0 %2664
        %2666 = vrot.lane.b32.xlu0 %v2649, 112
        %v2667 = vpop.permute.xlu0 %2666
        %2668 = vrot.lane.b32.xlu0 %v2650, 112
        %v2669 = vpop.permute.xlu0 %2668
        %2670 = vrot.lane.b32.xlu0 %v2651, 112
        %v2671 = vpop.permute.xlu0 %2670
        %2672 = vrot.lane.b32.xlu0 %v2652, 112
        %v2673 = vpop.permute.xlu0 %2672
        %2674 = vrot.lane.b32.xlu0 %v2653, 112
        %v2675 = vpop.permute.xlu0 %2674
        %2676 = vrot.lane.b32.xlu0 %v2654, 112
        %v2677 = vpop.permute.xlu0 %2676
        %2678 = vrot.lane.b32.xlu0 %v2655, 112
        %v2679 = vpop.permute.xlu0 %2678
        %2680 = vrot.lane.b32.xlu0 %v2656, 112
        %v2681 = vpop.permute.xlu0 %2680
        %2682 = vrot.lane.b32.xlu0 %v2657, 112
        %v2683 = vpop.permute.xlu0 %2682
        %2684 = vrot.lane.b32.xlu0 %v2658, 112
        %v2685 = vpop.permute.xlu0 %2684
        %2686 = vrot.lane.b32.xlu0 %v2659, 112
        %v2687 = vpop.permute.xlu0 %2686
        %2688 = vrot.lane.b32.xlu0 %v2660, 112
        %v2689 = vpop.permute.xlu0 %2688
        %2690 = vrot.lane.b32.xlu0 %v2661, 112
        %v2691 = vpop.permute.xlu0 %2690
        %2692 = vrot.lane.b32.xlu0 %v2662, 112
        %v2693 = vpop.permute.xlu0 %2692
        %2694 = vrot.lane.b32.xlu0 %v2663, 112
        %v2695 = vpop.permute.xlu0 %2694
        %v2696 = vunpack.c.l.b16 %v1931
        %v2697 = vunpack.c.l.b16 %v1934
        %v2698 = vunpack.c.l.b16 %v1938
        %v2699 = vunpack.c.l.b16 %v1941
        %v2700 = vunpack.c.l.b16 %v1945
        %v2701 = vunpack.c.l.b16 %v1948
        %v2702 = vunpack.c.l.b16 %v1952
        %v2703 = vunpack.c.l.b16 %v1955
        %v2704 = vunpack.c.l.b16 %v1959
        %v2705 = vunpack.c.l.b16 %v1962
        %v2706 = vunpack.c.l.b16 %v1966
        %v2707 = vunpack.c.l.b16 %v1969
        %v2708 = vunpack.c.l.b16 %v1973
        %v2709 = vunpack.c.l.b16 %v1976
        %v2710 = vunpack.c.l.b16 %v1980
        %v2711 = vunpack.c.l.b16 %v1983
        %v2712 = vunpack.c.l.b16 %v1987
        %v2713 = vunpack.c.l.b16 %v1990
        %v2714 = vunpack.c.l.b16 %v1994
        %v2715 = vunpack.c.l.b16 %v1997
        %v2716 = vunpack.c.l.b16 %v2001
        %v2717 = vunpack.c.l.b16 %v2004
        %v2718 = vunpack.c.l.b16 %v2008
        %v2719 = vunpack.c.l.b16 %v2011
        %v2720 = vunpack.c.l.b16 %v2015
        %v2721 = vunpack.c.l.b16 %v2018
        %v2722 = vunpack.c.l.b16 %v2022
        %v2723 = vunpack.c.l.b16 %v2025
        %v2724 = vunpack.c.l.b16 %v2029
        %v2725 = vunpack.c.l.b16 %v2032
        %v2726 = vunpack.c.l.b16 %v2036
        %v2727 = vunpack.c.l.b16 %v2039
        %v2728 = vpack.c.b16 %v2697, %v2696
        %v2729 = vpack.c.b16 %v2699, %v2698
        %v2730 = vpack.c.b16 %v2701, %v2700
        %v2731 = vpack.c.b16 %v2703, %v2702
        %v2732 = vpack.c.b16 %v2705, %v2704
        %v2733 = vpack.c.b16 %v2707, %v2706
        %v2734 = vpack.c.b16 %v2709, %v2708
        %v2735 = vpack.c.b16 %v2711, %v2710
        %v2736 = vpack.c.b16 %v2713, %v2712
        %v2737 = vpack.c.b16 %v2715, %v2714
        %v2738 = vpack.c.b16 %v2717, %v2716
        %v2739 = vpack.c.b16 %v2719, %v2718
        %v2740 = vpack.c.b16 %v2721, %v2720
        %v2741 = vpack.c.b16 %v2723, %v2722
        %v2742 = vpack.c.b16 %v2725, %v2724
        %v2743 = vpack.c.b16 %v2727, %v2726
        %vm2744 = vcmask 130048
        %v2747 = vsel %vm2744, %v2088, %v2153
        %v2750 = vsel %vm2744, %v2089, %v2155
        %v2753 = vsel %vm2744, %v2090, %v2157
        %v2756 = vsel %vm2744, %v2091, %v2159
        %v2759 = vsel %vm2744, %v2092, %v2161
        %v2762 = vsel %vm2744, %v2093, %v2163
        %v2765 = vsel %vm2744, %v2094, %v2165
        %v2768 = vsel %vm2744, %v2095, %v2167
        %v2771 = vsel %vm2744, %v2096, %v2169
        %v2774 = vsel %vm2744, %v2097, %v2171
        %v2777 = vsel %vm2744, %v2098, %v2173
        %v2780 = vsel %vm2744, %v2099, %v2175
        %v2783 = vsel %vm2744, %v2100, %v2177
        %v2786 = vsel %vm2744, %v2101, %v2179
        %v2789 = vsel %vm2744, %v2102, %v2181
        %v2792 = vsel %vm2744, %v2103, %v2183
        %vm2793 = vcmask 261120
        %v2795 = vsel %vm2793, %v2747, %v2233
        %v2797 = vsel %vm2793, %v2750, %v2235
        %v2799 = vsel %vm2793, %v2753, %v2237
        %v2801 = vsel %vm2793, %v2756, %v2239
        %v2803 = vsel %vm2793, %v2759, %v2241
        %v2805 = vsel %vm2793, %v2762, %v2243
        %v2807 = vsel %vm2793, %v2765, %v2245
        %v2809 = vsel %vm2793, %v2768, %v2247
        %v2811 = vsel %vm2793, %v2771, %v2249
        %v2813 = vsel %vm2793, %v2774, %v2251
        %v2815 = vsel %vm2793, %v2777, %v2253
        %v2817 = vsel %vm2793, %v2780, %v2255
        %v2819 = vsel %vm2793, %v2783, %v2257
        %v2821 = vsel %vm2793, %v2786, %v2259
        %v2823 = vsel %vm2793, %v2789, %v2261
        %v2825 = vsel %vm2793, %v2792, %v2263
        %vm2826 = vcmask 392192
        %v2828 = vsel %vm2826, %v2795, %v2329
        %v2830 = vsel %vm2826, %v2797, %v2331
        %v2832 = vsel %vm2826, %v2799, %v2333
        %v2834 = vsel %vm2826, %v2801, %v2335
        %v2836 = vsel %vm2826, %v2803, %v2337
        %v2838 = vsel %vm2826, %v2805, %v2339
        %v2840 = vsel %vm2826, %v2807, %v2341
        %v2842 = vsel %vm2826, %v2809, %v2343
        %v2844 = vsel %vm2826, %v2811, %v2345
        %v2846 = vsel %vm2826, %v2813, %v2347
        %v2848 = vsel %vm2826, %v2815, %v2349
        %v2850 = vsel %vm2826, %v2817, %v2351
        %v2852 = vsel %vm2826, %v2819, %v2353
        %v2854 = vsel %vm2826, %v2821, %v2355
        %v2856 = vsel %vm2826, %v2823, %v2357
        %v2858 = vsel %vm2826, %v2825, %v2359
        %vm2859 = vcmask 523264
        %v2861 = vsel %vm2859, %v2828, %v2409
        %v2863 = vsel %vm2859, %v2830, %v2411
        %v2865 = vsel %vm2859, %v2832, %v2413
        %v2867 = vsel %vm2859, %v2834, %v2415
        %v2869 = vsel %vm2859, %v2836, %v2417
        %v2871 = vsel %vm2859, %v2838, %v2419
        %v2873 = vsel %vm2859, %v2840, %v2421
        %v2875 = vsel %vm2859, %v2842, %v2423
        %v2877 = vsel %vm2859, %v2844, %v2425
        %v2879 = vsel %vm2859, %v2846, %v2427
        %v2881 = vsel %vm2859, %v2848, %v2429
        %v2883 = vsel %vm2859, %v2850, %v2431
        %v2885 = vsel %vm2859, %v2852, %v2433
        %v2887 = vsel %vm2859, %v2854, %v2435
        %v2889 = vsel %vm2859, %v2856, %v2437
        %v2891 = vsel %vm2859, %v2858, %v2439
        %vm2892 = vcmask 654336
        %v2894 = vsel %vm2892, %v2861, %v2489
        %v2896 = vsel %vm2892, %v2863, %v2491
        %v2898 = vsel %vm2892, %v2865, %v2493
        %v2900 = vsel %vm2892, %v2867, %v2495
        %v2902 = vsel %vm2892, %v2869, %v2497
        %v2904 = vsel %vm2892, %v2871, %v2499
        %v2906 = vsel %vm2892, %v2873, %v2501
        %v2908 = vsel %vm2892, %v2875, %v2503
        %v2910 = vsel %vm2892, %v2877, %v2505
        %v2912 = vsel %vm2892, %v2879, %v2507
        %v2914 = vsel %vm2892, %v2881, %v2509
        %v2916 = vsel %vm2892, %v2883, %v2511
        %v2918 = vsel %vm2892, %v2885, %v2513
        %v2920 = vsel %vm2892, %v2887, %v2515
        %v2922 = vsel %vm2892, %v2889, %v2517
        %v2924 = vsel %vm2892, %v2891, %v2519
        %vm2925 = vcmask 785408
        %v2927 = vsel %vm2925, %v2894, %v2585
        %v2929 = vsel %vm2925, %v2896, %v2587
        %v2931 = vsel %vm2925, %v2898, %v2589
        %v2933 = vsel %vm2925, %v2900, %v2591
        %v2935 = vsel %vm2925, %v2902, %v2593
        %v2937 = vsel %vm2925, %v2904, %v2595
        %v2939 = vsel %vm2925, %v2906, %v2597
        %v2941 = vsel %vm2925, %v2908, %v2599
        %v2943 = vsel %vm2925, %v2910, %v2601
        %v2945 = vsel %vm2925, %v2912, %v2603
        %v2947 = vsel %vm2925, %v2914, %v2605
        %v2949 = vsel %vm2925, %v2916, %v2607
        %v2951 = vsel %vm2925, %v2918, %v2609
        %v2953 = vsel %vm2925, %v2920, %v2611
        %v2955 = vsel %vm2925, %v2922, %v2613
        %v2957 = vsel %vm2925, %v2924, %v2615
        %vm2958 = vcmask 916480
        %v2960 = vsel %vm2958, %v2927, %v2665
        %v2963 = vsel %vm2958, %v2929, %v2667
        %v2966 = vsel %vm2958, %v2931, %v2669
        %v2969 = vsel %vm2958, %v2933, %v2671
        %v2972 = vsel %vm2958, %v2935, %v2673
        %v2975 = vsel %vm2958, %v2937, %v2675
        %v2978 = vsel %vm2958, %v2939, %v2677
        %v2981 = vsel %vm2958, %v2941, %v2679
        %v2984 = vsel %vm2958, %v2943, %v2681
        %v2987 = vsel %vm2958, %v2945, %v2683
        %v2990 = vsel %vm2958, %v2947, %v2685
        %v2993 = vsel %vm2958, %v2949, %v2687
        %v2996 = vsel %vm2958, %v2951, %v2689
        %v2999 = vsel %vm2958, %v2953, %v2691
        %v3002 = vsel %vm2958, %v2955, %v2693
        %v3005 = vsel %vm2958, %v2957, %v2695
        %v3007 = vld [vmem:[%s1] sm:$0xf]
        %v3008 = vld [vmem:[%s1 + $0x4] sm:$0xf]
        %v3009 = vld [vmem:[%s1 + $0x8] sm:$0xf]
        %v3010 = vld [vmem:[%s1 + $0xc] sm:$0xf]
        %v3011 = vld [vmem:[%s1 + $0x10] sm:$0xf]
        %v3012 = vld [vmem:[%s1 + $0x14] sm:$0xf]
        %v3013 = vld [vmem:[%s1 + $0x18] sm:$0xf]
        %v3014 = vld [vmem:[%s1 + $0x1c] sm:$0xf]
        %v3015 = vld [vmem:[%s1 + $0x20] sm:$0xf]
        %v3016 = vld [vmem:[%s1 + $0x24] sm:$0xf]
        %v3017 = vld [vmem:[%s1 + $0x28] sm:$0xf]
        %v3018 = vld [vmem:[%s1 + $0x2c] sm:$0xf]
        %v3019 = vld [vmem:[%s1 + $0x30] sm:$0xf]
        %v3020 = vld [vmem:[%s1 + $0x34] sm:$0xf]
        %v3021 = vld [vmem:[%s1 + $0x38] sm:$0xf]
        %v3022 = vld [vmem:[%s1 + $0x3c] sm:$0xf]
        %v3023 = vld [vmem:[%s1 + $0x40] sm:$0xf]
        %v3024 = vld [vmem:[%s1 + $0x44] sm:$0xf]
        %v3043 = vunpack.c.l.b16 %v3007
        %v3044 = vunpack.c.l.b16 %v3008
        %v3045 = vunpack.c.l.b16 %v3009
        %v3046 = vunpack.c.l.b16 %v3010
        %v3047 = vunpack.c.l.b16 %v3011
        %v3048 = vunpack.c.l.b16 %v3012
        %v3049 = vunpack.c.l.b16 %v3013
        %v3050 = vunpack.c.l.b16 %v3014
        %v3051 = vunpack.c.l.b16 %v3015
        %v3052 = vunpack.c.l.b16 %v3016
        %v3053 = vunpack.c.l.b16 %v3017
        %v3054 = vunpack.c.l.b16 %v3018
        %v3055 = vunpack.c.l.b16 %v3019
        %v3056 = vunpack.c.l.b16 %v3020
        %v3057 = vunpack.c.l.b16 %v3021
        %v3058 = vunpack.c.l.b16 %v3022
        %v3059 = vunpack.c.l.b16 %v3023
        %v3060 = vunpack.c.l.b16 %v3024
        %v3061 = vpack.c.b16 %v3044, %v3043
        %v3062 = vpack.c.b16 %v3046, %v3045
        %v3063 = vpack.c.b16 %v3048, %v3047
        %v3064 = vpack.c.b16 %v3050, %v3049
        %v3065 = vpack.c.b16 %v3052, %v3051
        %v3066 = vpack.c.b16 %v3054, %v3053
        %v3067 = vpack.c.b16 %v3056, %v3055
        %v3068 = vpack.c.b16 %v3058, %v3057
        %v3069 = vpack.c.b16 %v3060, %v3059
        %v3080 = vsel %vm2744, %v2728, 0
        %v3083 = vsel %vm2744, %v2729, 0
        %v3086 = vsel %vm2744, %v2730, 0
        %v3089 = vsel %vm2744, %v2731, 0
        %v3092 = vsel %vm2744, %v2732, 0
        %v3095 = vsel %vm2744, %v2733, 0
        %v3098 = vsel %vm2744, %v2734, 0
        %v3101 = vsel %vm2744, %v2735, 0
        %v3104 = vsel %vm2744, %v2736, 0
        %v3107 = vsel %vm2744, %v2737, 0
        %v3110 = vsel %vm2744, %v2738, 0
        %v3113 = vsel %vm2744, %v2739, 0
        %v3116 = vsel %vm2744, %v2740, 0
        %v3119 = vsel %vm2744, %v2741, 0
        %v3122 = vsel %vm2744, %v2742, 0
        %v3125 = vsel %vm2744, %v2743, 0
        %3127 = vmatprep.subr.bf16.mxu0 0
        %3128 = vmatpush1.bf16.msra.mxu0 %v3068
        %3129 = vmatprep.subr.bf16.mxu0 0
        %3130 = vmatpush1.bf16.msra.mxu0 %v3067
        %3131 = vmatprep.subr.bf16.mxu0 0
        %3132 = vmatpush1.bf16.msra.mxu0 %v3066
        %3133 = vmatprep.subr.bf16.mxu0 0
        %3134 = vmatpush1.bf16.msra.mxu0 %v3065
        %3135 = vmatprep.subr.bf16.mxu0 0
        %3136 = vmatpush1.bf16.msra.mxu0 %v3064
        %3137 = vmatprep.subr.bf16.mxu0 0
        %3138 = vmatpush1.bf16.msra.mxu0 %v3063
        %3139 = vmatprep.subr.bf16.mxu0 0
        %3140 = vmatpush1.bf16.msra.mxu0 %v3062
        %3141 = vmatprep.subr.bf16.mxu0 0
        %3142 = vmatpush1.bf16.msra.mxu0 %v3061
        %3143 = vmatprep.subr.bf16.mxu0 0
        %3144 = vmatpush2.bf16.msra.mxu0 0
        %3145 = vmatprep.subr.bf16.mxu0 0
        %3146 = vmatpush2.bf16.msra.mxu0 0
        %3147 = vmatprep.subr.bf16.mxu0 0
        %3148 = vmatpush2.bf16.msra.mxu0 0
        %3149 = vmatprep.subr.bf16.mxu0 0
        %3150 = vmatpush2.bf16.msra.mxu0 0
        %3151 = vmatprep.subr.bf16.mxu0 0
        %3152 = vmatpush2.bf16.msra.mxu0 0
        %3153 = vmatprep.subr.bf16.mxu0 0
        %3154 = vmatpush2.bf16.msra.mxu0 0
        %3155 = vmatprep.subr.bf16.mxu0 0
        %3156 = vmatpush2.bf16.msra.mxu0 0
        %3157 = vmatprep.subr.bf16.mxu0 0
        %3158 = vmatpush2.bf16.msra.mxu0 %v3069
        %3159 = vmatprep.mubr.bf16.mxu0 %v3080
        %3160 = vmatmul.mubr.bf16.gmra.mxu0 %v2960
        %v3161 = vpop.f32.mrf.mxu0
        %v3162 = vadd.f32 0.0, %v3161
        %v3163 = vpop.f32.mrf.mxu0
        %v3164 = vpop.f32.mrf.mxu0
        %v3165 = vadd.f32 0.0, %v3164
        %v3166 = vpop.f32.mrf.mxu0
        %3167 = vmatprep.mubr.bf16.mxu0 %v3083
        %3168 = vmatmul.mubr.bf16.gmra.mxu0 %v2963
        %v3169 = vpop.f32.mrf.mxu0
        %v3170 = vadd.f32 0.0, %v3169
        %v3171 = vpop.f32.mrf.mxu0
        %v3172 = vpop.f32.mrf.mxu0
        %v3173 = vadd.f32 0.0, %v3172
        %v3174 = vpop.f32.mrf.mxu0
        %3175 = vmatprep.mubr.bf16.mxu0 %v3086
        %3176 = vmatmul.mubr.bf16.gmra.mxu0 %v2966
        %v3177 = vpop.f32.mrf.mxu0
        %v3178 = vadd.f32 0.0, %v3177
        %v3179 = vpop.f32.mrf.mxu0
        %v3180 = vpop.f32.mrf.mxu0
        %v3181 = vadd.f32 0.0, %v3180
        %v3182 = vpop.f32.mrf.mxu0
        %3183 = vmatprep.mubr.bf16.mxu0 %v3089
        %3184 = vmatmul.mubr.bf16.gmra.mxu0 %v2969
        %v3185 = vpop.f32.mrf.mxu0
        %v3186 = vadd.f32 0.0, %v3185
        %v3187 = vpop.f32.mrf.mxu0
        %v3188 = vpop.f32.mrf.mxu0
        %v3189 = vadd.f32 0.0, %v3188
        %v3190 = vpop.f32.mrf.mxu0
        %3191 = vmatprep.mubr.bf16.mxu0 %v3092
        %3192 = vmatmul.mubr.bf16.gmra.mxu0 %v2972
        %v3193 = vpop.f32.mrf.mxu0
        %v3194 = vadd.f32 0.0, %v3193
        %v3195 = vpop.f32.mrf.mxu0
        %v3196 = vpop.f32.mrf.mxu0
        %v3197 = vadd.f32 0.0, %v3196
        %v3198 = vpop.f32.mrf.mxu0
        %3199 = vmatprep.mubr.bf16.mxu0 %v3095
        %3200 = vmatmul.mubr.bf16.gmra.mxu0 %v2975
        %v3201 = vpop.f32.mrf.mxu0
        %v3202 = vadd.f32 0.0, %v3201
        %v3203 = vpop.f32.mrf.mxu0
        %v3204 = vpop.f32.mrf.mxu0
        %v3205 = vadd.f32 0.0, %v3204
        %v3206 = vpop.f32.mrf.mxu0
        %3207 = vmatprep.mubr.bf16.mxu0 %v3098
        %3208 = vmatmul.mubr.bf16.gmra.mxu0 %v2978
        %v3209 = vpop.f32.mrf.mxu0
        %v3210 = vadd.f32 0.0, %v3209
        %v3211 = vpop.f32.mrf.mxu0
        %v3212 = vpop.f32.mrf.mxu0
        %v3213 = vadd.f32 0.0, %v3212
        %v3214 = vpop.f32.mrf.mxu0
        %3215 = vmatprep.mubr.bf16.mxu0 %v3101
        %3216 = vmatmul.mubr.bf16.gmra.mxu0 %v2981
        %v3217 = vpop.f32.mrf.mxu0
        %v3218 = vadd.f32 0.0, %v3217
        %v3219 = vpop.f32.mrf.mxu0
        %v3220 = vpop.f32.mrf.mxu0
        %v3221 = vadd.f32 0.0, %v3220
        %v3222 = vpop.f32.mrf.mxu0
        %3223 = vmatprep.mubr.bf16.mxu0 %v3104
        %3224 = vmatmul.mubr.bf16.gmra.mxu0 %v2984
        %v3225 = vpop.f32.mrf.mxu0
        %v3226 = vadd.f32 0.0, %v3225
        %v3227 = vpop.f32.mrf.mxu0
        %v3228 = vpop.f32.mrf.mxu0
        %v3229 = vadd.f32 0.0, %v3228
        %v3230 = vpop.f32.mrf.mxu0
        %3231 = vmatprep.mubr.bf16.mxu0 %v3107
        %3232 = vmatmul.mubr.bf16.gmra.mxu0 %v2987
        %v3233 = vpop.f32.mrf.mxu0
        %v3234 = vadd.f32 0.0, %v3233
        %v3235 = vpop.f32.mrf.mxu0
        %v3236 = vpop.f32.mrf.mxu0
        %v3237 = vadd.f32 0.0, %v3236
        %v3238 = vpop.f32.mrf.mxu0
        %3239 = vmatprep.mubr.bf16.mxu0 %v3110
        %3240 = vmatmul.mubr.bf16.gmra.mxu0 %v2990
        %v3241 = vpop.f32.mrf.mxu0
        %v3242 = vadd.f32 0.0, %v3241
        %v3243 = vpop.f32.mrf.mxu0
        %v3244 = vpop.f32.mrf.mxu0
        %v3245 = vadd.f32 0.0, %v3244
        %v3246 = vpop.f32.mrf.mxu0
        %3247 = vmatprep.mubr.bf16.mxu0 %v3113
        %3248 = vmatmul.mubr.bf16.gmra.mxu0 %v2993
        %v3249 = vpop.f32.mrf.mxu0
        %v3250 = vadd.f32 0.0, %v3249
        %v3251 = vpop.f32.mrf.mxu0
        %v3252 = vpop.f32.mrf.mxu0
        %v3253 = vadd.f32 0.0, %v3252
        %v3254 = vpop.f32.mrf.mxu0
        %3255 = vmatprep.mubr.bf16.mxu0 %v3116
        %3256 = vmatmul.mubr.bf16.gmra.mxu0 %v2996
        %v3257 = vpop.f32.mrf.mxu0
        %v3258 = vadd.f32 0.0, %v3257
        %v3259 = vpop.f32.mrf.mxu0
        %v3260 = vpop.f32.mrf.mxu0
        %v3261 = vadd.f32 0.0, %v3260
        %v3262 = vpop.f32.mrf.mxu0
        %3263 = vmatprep.mubr.bf16.mxu0 %v3119
        %3264 = vmatmul.mubr.bf16.gmra.mxu0 %v2999
        %v3265 = vpop.f32.mrf.mxu0
        %v3266 = vadd.f32 0.0, %v3265
        %v3267 = vpop.f32.mrf.mxu0
        %v3268 = vpop.f32.mrf.mxu0
        %v3269 = vadd.f32 0.0, %v3268
        %v3270 = vpop.f32.mrf.mxu0
        %3271 = vmatprep.mubr.bf16.mxu0 %v3122
        %3272 = vmatmul.mubr.bf16.gmra.mxu0 %v3002
        %v3273 = vpop.f32.mrf.mxu0
        %v3274 = vadd.f32 0.0, %v3273
        %v3275 = vpop.f32.mrf.mxu0
        %v3276 = vpop.f32.mrf.mxu0
        %v3277 = vadd.f32 0.0, %v3276
        %v3278 = vpop.f32.mrf.mxu0
        %3279 = vmatprep.mubr.bf16.mxu0 %v3125
        %3280 = vmatmul.mubr.bf16.gmra.mxu0 %v3005
        %v3281 = vpop.f32.mrf.mxu0
        %v3282 = vadd.f32 0.0, %v3281
        %v3283 = vpop.f32.mrf.mxu0
        %v3284 = vpop.f32.mrf.mxu0
        %v3285 = vadd.f32 0.0, %v3284
        %v3286 = vpop.f32.mrf.mxu0
        %3287 = vdwg.mxu0
        %v3288 = vpack.c.bf16 %v3165, %v3162
        %v3289 = vpack.c.bf16 %v3173, %v3170
        %v3290 = vpack.c.bf16 %v3181, %v3178
        %v3291 = vpack.c.bf16 %v3189, %v3186
        %v3292 = vpack.c.bf16 %v3197, %v3194
        %v3293 = vpack.c.bf16 %v3205, %v3202
        %v3294 = vpack.c.bf16 %v3213, %v3210
        %v3295 = vpack.c.bf16 %v3221, %v3218
        %v3296 = vpack.c.bf16 %v3229, %v3226
        %v3297 = vpack.c.bf16 %v3237, %v3234
        %v3298 = vpack.c.bf16 %v3245, %v3242
        %v3299 = vpack.c.bf16 %v3253, %v3250
        %v3300 = vpack.c.bf16 %v3261, %v3258
        %v3301 = vpack.c.bf16 %v3269, %v3266
        %v3302 = vpack.c.bf16 %v3277, %v3274
        %v3303 = vpack.c.bf16 %v3285, %v3282
        %v3320 = vunpack.c.l.b16 %v3288
        %v3321 = vunpack.c.h.b16 %v3288
        %v3322 = vunpack.c.l.b16 %v3289
        %v3323 = vunpack.c.h.b16 %v3289
        %v3324 = vunpack.c.l.b16 %v3290
        %v3325 = vunpack.c.h.b16 %v3290
        %v3326 = vunpack.c.l.b16 %v3291
        %v3327 = vunpack.c.h.b16 %v3291
        %v3328 = vunpack.c.l.b16 %v3292
        %v3329 = vunpack.c.h.b16 %v3292
        %v3330 = vunpack.c.l.b16 %v3293
        %v3331 = vunpack.c.h.b16 %v3293
        %v3332 = vunpack.c.l.b16 %v3294
        %v3333 = vunpack.c.h.b16 %v3294
        %v3334 = vunpack.c.l.b16 %v3295
        %v3335 = vunpack.c.h.b16 %v3295
        %v3336 = vunpack.c.l.b16 %v3296
        %v3337 = vunpack.c.h.b16 %v3296
        %v3338 = vunpack.c.l.b16 %v3297
        %v3339 = vunpack.c.h.b16 %v3297
        %v3340 = vunpack.c.l.b16 %v3298
        %v3341 = vunpack.c.h.b16 %v3298
        %v3342 = vunpack.c.l.b16 %v3299
        %v3343 = vunpack.c.h.b16 %v3299
        %v3344 = vunpack.c.l.b16 %v3300
        %v3345 = vunpack.c.h.b16 %v3300
        %v3346 = vunpack.c.l.b16 %v3301
        %v3347 = vunpack.c.h.b16 %v3301
        %v3348 = vunpack.c.l.b16 %v3302
        %v3349 = vunpack.c.h.b16 %v3302
        %v3350 = vunpack.c.l.b16 %v3303
        %v3351 = vunpack.c.h.b16 %v3303
        %v3352 = vpack.c.b16 %v3320, %v3320
        %v3353 = vpack.c.b16 %v3321, %v3321
        %v3354 = vpack.c.b16 %v3322, %v3322
        %v3355 = vpack.c.b16 %v3323, %v3323
        %v3356 = vpack.c.b16 %v3324, %v3324
        %v3357 = vpack.c.b16 %v3325, %v3325
        %v3358 = vpack.c.b16 %v3326, %v3326
        %v3359 = vpack.c.b16 %v3327, %v3327
        %v3360 = vpack.c.b16 %v3328, %v3328
        %v3361 = vpack.c.b16 %v3329, %v3329
        %v3362 = vpack.c.b16 %v3330, %v3330
        %v3363 = vpack.c.b16 %v3331, %v3331
        %v3364 = vpack.c.b16 %v3332, %v3332
        %v3365 = vpack.c.b16 %v3333, %v3333
        %v3366 = vpack.c.b16 %v3334, %v3334
        %v3367 = vpack.c.b16 %v3335, %v3335
        %v3368 = vpack.c.b16 %v3336, %v3336
        %v3369 = vpack.c.b16 %v3337, %v3337
        %v3370 = vpack.c.b16 %v3338, %v3338
        %v3371 = vpack.c.b16 %v3339, %v3339
        %v3372 = vpack.c.b16 %v3340, %v3340
        %v3373 = vpack.c.b16 %v3341, %v3341
        %v3374 = vpack.c.b16 %v3342, %v3342
        %v3375 = vpack.c.b16 %v3343, %v3343
        %v3376 = vpack.c.b16 %v3344, %v3344
        %v3377 = vpack.c.b16 %v3345, %v3345
        %v3378 = vpack.c.b16 %v3346, %v3346
        %v3379 = vpack.c.b16 %v3347, %v3347
        %v3380 = vpack.c.b16 %v3348, %v3348
        %v3381 = vpack.c.b16 %v3349, %v3349
        %v3382 = vpack.c.b16 %v3350, %v3350
        %v3383 = vpack.c.b16 %v3351, %v3351
        %3416 = vst [vmem:[%s183] sm:$0xf] %v3352
        %3417 = vst [vmem:[%s183 + $0x4] sm:$0xf] %v3353
        %3418 = vst [vmem:[%s183 + $0x8] sm:$0xf] %v3354
        %3419 = vst [vmem:[%s183 + $0xc] sm:$0xf] %v3355
        %3420 = vst [vmem:[%s183 + $0x10] sm:$0xf] %v3356
        %3421 = vst [vmem:[%s183 + $0x14] sm:$0xf] %v3357
        %3422 = vst [vmem:[%s183 + $0x18] sm:$0xf] %v3358
        %3423 = vst [vmem:[%s183 + $0x1c] sm:$0xf] %v3359
        %3424 = vst [vmem:[%s183 + $0x20] sm:$0xf] %v3360
        %3425 = vst [vmem:[%s183 + $0x24] sm:$0xf] %v3361
        %3426 = vst [vmem:[%s183 + $0x28] sm:$0xf] %v3362
        %3427 = vst [vmem:[%s183 + $0x2c] sm:$0xf] %v3363
        %3428 = vst [vmem:[%s183 + $0x30] sm:$0xf] %v3364
        %3429 = vst [vmem:[%s183 + $0x34] sm:$0xf] %v3365
        %3430 = vst [vmem:[%s183 + $0x38] sm:$0xf] %v3366
        %3431 = vst [vmem:[%s183 + $0x3c] sm:$0xf] %v3367
        %3432 = vst [vmem:[%s183 + $0x40] sm:$0xf] %v3368
        %3433 = vst [vmem:[%s183 + $0x44] sm:$0xf] %v3369
        %3434 = vst [vmem:[%s183 + $0x48] sm:$0xf] %v3370
        %3435 = vst [vmem:[%s183 + $0x4c] sm:$0xf] %v3371
        %3436 = vst [vmem:[%s183 + $0x50] sm:$0xf] %v3372
        %3437 = vst [vmem:[%s183 + $0x54] sm:$0xf] %v3373
        %3438 = vst [vmem:[%s183 + $0x58] sm:$0xf] %v3374
        %3439 = vst [vmem:[%s183 + $0x5c] sm:$0xf] %v3375
        %3440 = vst [vmem:[%s183 + $0x60] sm:$0xf] %v3376
        %3441 = vst [vmem:[%s183 + $0x64] sm:$0xf] %v3377
        %3442 = vst [vmem:[%s183 + $0x68] sm:$0xf] %v3378
        %3443 = vst [vmem:[%s183 + $0x6c] sm:$0xf] %v3379
        %3444 = vst [vmem:[%s183 + $0x70] sm:$0xf] %v3380
        %3445 = vst [vmem:[%s183 + $0x74] sm:$0xf] %v3381
        %3446 = vst [vmem:[%s183 + $0x78] sm:$0xf] %v3382
        %3447 = vst [vmem:[%s183 + $0x7c] sm:$0xf] %v3383
        %v3448 = vadd.f32 %v3162, %v3165
        %v3449 = vadd.f32 %v3448, %v3170
        %v3450 = vadd.f32 %v3449, %v3173
        %v3451 = vadd.f32 %v3450, %v3178
        %v3452 = vadd.f32 %v3451, %v3181
        %v3453 = vadd.f32 %v3452, %v3186
        %v3454 = vadd.f32 %v3453, %v3189
        %v3455 = vadd.f32 %v3454, %v3194
        %v3456 = vadd.f32 %v3455, %v3197
        %v3457 = vadd.f32 %v3456, %v3202
        %v3458 = vadd.f32 %v3457, %v3205
        %v3459 = vadd.f32 %v3458, %v3210
        %v3460 = vadd.f32 %v3459, %v3213
        %v3461 = vadd.f32 %v3460, %v3218
        %v3462 = vadd.f32 %v3461, %v3221
        %v3463 = vadd.f32 %v3462, %v3226
        %v3464 = vadd.f32 %v3463, %v3229
        %v3465 = vadd.f32 %v3464, %v3234
        %v3466 = vadd.f32 %v3465, %v3237
        %v3467 = vadd.f32 %v3466, %v3242
        %v3468 = vadd.f32 %v3467, %v3245
        %v3469 = vadd.f32 %v3468, %v3250
        %v3470 = vadd.f32 %v3469, %v3253
        %v3471 = vadd.f32 %v3470, %v3258
        %v3472 = vadd.f32 %v3471, %v3261
        %v3473 = vadd.f32 %v3472, %v3266
        %v3474 = vadd.f32 %v3473, %v3269
        %v3475 = vadd.f32 %v3474, %v3274
        %v3476 = vadd.f32 %v3475, %v3277
        %v3477 = vadd.f32 %v3476, %v3282
        %v3478 = vadd.f32 %v3477, %v3285
        %v3479 = vrot.slane %v3478, 4
        %v3480 = vadd.f32 %v3478, %v3479
        %v3481 = vrot.slane %v3480, 2
        %v3482 = vadd.f32 %v3480, %v3481
        %v3483 = vrot.slane %v3482, 1
        %v3484 = vadd.f32 %v3482, %v3483
        %3485 = vst [vmem:[%s190] sm:$0x1] %v3484
        %v3486 = vmul.f32 %v3162, %v3162
        %v3487 = vmul.f32 %v3165, %v3165
        %v3488 = vmul.f32 %v3170, %v3170
        %v3489 = vmul.f32 %v3173, %v3173
        %v3490 = vmul.f32 %v3178, %v3178
        %v3491 = vmul.f32 %v3181, %v3181
        %v3492 = vmul.f32 %v3186, %v3186
        %v3493 = vmul.f32 %v3189, %v3189
        %v3494 = vmul.f32 %v3194, %v3194
        %v3495 = vmul.f32 %v3197, %v3197
        %v3496 = vmul.f32 %v3202, %v3202
        %v3497 = vmul.f32 %v3205, %v3205
        %v3498 = vmul.f32 %v3210, %v3210
        %v3499 = vmul.f32 %v3213, %v3213
        %v3500 = vmul.f32 %v3218, %v3218
        %v3501 = vmul.f32 %v3221, %v3221
        %v3502 = vmul.f32 %v3226, %v3226
        %v3503 = vmul.f32 %v3229, %v3229
        %v3504 = vmul.f32 %v3234, %v3234
        %v3505 = vmul.f32 %v3237, %v3237
        %v3506 = vmul.f32 %v3242, %v3242
        %v3507 = vmul.f32 %v3245, %v3245
        %v3508 = vmul.f32 %v3250, %v3250
        %v3509 = vmul.f32 %v3253, %v3253
        %v3510 = vmul.f32 %v3258, %v3258
        %v3511 = vmul.f32 %v3261, %v3261
        %v3512 = vmul.f32 %v3266, %v3266
        %v3513 = vmul.f32 %v3269, %v3269
        %v3514 = vmul.f32 %v3274, %v3274
        %v3515 = vmul.f32 %v3277, %v3277
        %v3516 = vmul.f32 %v3282, %v3282
        %v3517 = vmul.f32 %v3285, %v3285
        %v3518 = vadd.f32 %v3486, %v3487
        %v3519 = vadd.f32 %v3518, %v3488
        %v3520 = vadd.f32 %v3519, %v3489
        %v3521 = vadd.f32 %v3520, %v3490
        %v3522 = vadd.f32 %v3521, %v3491
        %v3523 = vadd.f32 %v3522, %v3492
        %v3524 = vadd.f32 %v3523, %v3493
        %v3525 = vadd.f32 %v3524, %v3494
        %v3526 = vadd.f32 %v3525, %v3495
        %v3527 = vadd.f32 %v3526, %v3496
        %v3528 = vadd.f32 %v3527, %v3497
        %v3529 = vadd.f32 %v3528, %v3498
        %v3530 = vadd.f32 %v3529, %v3499
        %v3531 = vadd.f32 %v3530, %v3500
        %v3532 = vadd.f32 %v3531, %v3501
        %v3533 = vadd.f32 %v3532, %v3502
        %v3534 = vadd.f32 %v3533, %v3503
        %v3535 = vadd.f32 %v3534, %v3504
        %v3536 = vadd.f32 %v3535, %v3505
        %v3537 = vadd.f32 %v3536, %v3506
        %v3538 = vadd.f32 %v3537, %v3507
        %v3539 = vadd.f32 %v3538, %v3508
        %v3540 = vadd.f32 %v3539, %v3509
        %v3541 = vadd.f32 %v3540, %v3510
        %v3542 = vadd.f32 %v3541, %v3511
        %v3543 = vadd.f32 %v3542, %v3512
        %v3544 = vadd.f32 %v3543, %v3513
        %v3545 = vadd.f32 %v3544, %v3514
        %v3546 = vadd.f32 %v3545, %v3515
        %v3547 = vadd.f32 %v3546, %v3516
        %v3548 = vadd.f32 %v3547, %v3517
        %v3549 = vrot.slane %v3548, 4
        %v3550 = vadd.f32 %v3548, %v3549
        %v3551 = vrot.slane %v3550, 2
        %v3552 = vadd.f32 %v3550, %v3551
        %v3553 = vrot.slane %v3552, 1
        %v3554 = vadd.f32 %v3552, %v3553
        %3555 = vst [vmem:[%s190 + $0x1] sm:$0x1] %v3554
        %s3556 = sand.u32 %s90, 1
        %s3557 = scalar_lea.sflag [#allocation3], %s3556
        %s3558 = sand.u32 %s90, 1
        %s3559 = smul.addr %s3558, 128
        %s3560 = scalar_lea.vmem [#allocation2], %s3559
        %s3561 = sand.u32 %s118, 1
        %s3562 = scalar_lea.sflag [#allocation5], %s3561
        %s3563 = sand.u32 %s118, 1
        %s3564 = smul.addr %s3563, 2
        %s3565 = scalar_lea.vmem [#allocation4], %s3564
        // Predicated region
        $region29: #{tpu_custom_call.1} parent=27 // pred_check
          %p3566 = pneg %p100
        $region30: #{tpu_custom_call.1} parent=27 // pred_check_branch
          %3568 = sbr.rel (%p3566) target = $region32
        $region31: #{tpu_custom_call.1} parent=27 // pred_region
          %s3569 = smul.u32 32, %s26
          %s3571 = ssub.s32 2048, 2048
          %3572 = vsyncadd %s3557, %s3571
          %s3573 = smul.addr %s25, 32
          %s3574 = sadd.s32 %s3569, %s3573
          %s3575 = smul.addr %s3574, 64
          %s3576 = scalar_lea.hbm %s2, %s3575
          %s3577 = sshll.u32 %s3560, 4
          %s3578 = int_to_ptr.vmem [resolvable:$true] %s3577
          %3583 = dma.vmem_to_hbm [thread:$0]  %s3578, 2048, %s3576, %s3557, 64, 64, 4
        $region32: #{tpu_custom_call.1} parent=27 // pred_fallthru
          _
        // Predicated region
        $region33: #{tpu_custom_call.1} parent=27 // pred_check
          %p3584 = pneg %p128
        $region34: #{tpu_custom_call.1} parent=27 // pred_check_branch
          %3586 = sbr.rel (%p3584) target = $region36
        $region35: #{tpu_custom_call.1} parent=27 // pred_region
          %s3588 = ssub.s32 32, 32
          %3589 = vsyncadd %s3562, %s3588
          %s3590 = sadd.s32 %s26, %s25
          %s3591 = smul.addr %s3590, 32
          %s3592 = scalar_lea.hbm %s3, %s3591
          %s3594 = sshll.u32 %s3565, 4
          %s3595 = int_to_ptr.vmem [resolvable:$true] %s3594
          %3597 = dma.vmem_to_hbm [thread:$0]  %s3595, 32, %s3592, %s3562
        $region36: #{tpu_custom_call.1} parent=27 // pred_fallthru
          _
      $region28: #{tpu_custom_call.1} parent=5 // pred_fallthru
        _
      %p3598 = scmp.le.s32.totalorder 2, %s16
      // Predicated region
      $region37: #{tpu_custom_call.1} parent=5 // pred_check
        %p3599 = pneg %p3598
      $region38: #{tpu_custom_call.1} parent=5 // pred_check_branch
        %3601 = sbr.rel (%p3599) target = $region40
      $region39: #{tpu_custom_call.1} parent=5 // pred_region
        %s3602 = ssub.s32 %s16, 2
        // Predicated region
        $region41: #{tpu_custom_call.1} parent=39 // pred_check
          %p3603 = pneg %p106
        $region42: #{tpu_custom_call.1} parent=39 // pred_check_branch
          %3605 = sbr.rel (%p3603) target = $region44
        $region43: #{tpu_custom_call.1} parent=39 // pred_region
          %s3606 = sand.u32 %s91, 1
          %s3607 = scalar_lea.sflag [#allocation3], %s3606
          %s3608 = sand.u32 %s91, 1
          %s3609 = smul.addr %s3608, 128
          %s3610 = scalar_lea.vmem [#allocation2], %s3609
          %3611 = dma.done %s3607, 2048
        $region44: #{tpu_custom_call.1} parent=39 // pred_fallthru
          _
        // Predicated region
        $region45: #{tpu_custom_call.1} parent=39 // pred_check
          %p3612 = pneg %p134
        $region46: #{tpu_custom_call.1} parent=39 // pred_check_branch
          %3614 = sbr.rel (%p3612) target = $region48
        $region47: #{tpu_custom_call.1} parent=39 // pred_region
          %s3615 = sand.u32 %s119, 1
          %s3616 = scalar_lea.sflag [#allocation5], %s3615
          %s3617 = sand.u32 %s119, 1
          %s3618 = smul.addr %s3617, 2
          %s3619 = scalar_lea.vmem [#allocation4], %s3618
          %3620 = dma.done %s3616, 32
        $region48: #{tpu_custom_call.1} parent=39 // pred_fallthru
          _
      $region40: #{tpu_custom_call.1} parent=5 // pred_fallthru
        _
    $region6: #{tpu_custom_call.1} parent=1 // loop_footer
      %s20 = sadd.s32 1, %s16
    $region7: #{tpu_custom_call.1} parent=1 // loop_footer_branch
      %15 = sbr.rel target = $region3
    $region8: #{tpu_custom_call.1} parent=1 // loop_exit
      _
    %3621 = vsyncpa [#allocation3], 1
    %s3622 = scalar_lea.sflag [#allocation3], 1
    %3623 = vsyncpa %s3622, 1
    %3624 = vsyncpa [#allocation5], 1
    %s3625 = scalar_lea.sflag [#allocation5], 1
    %3626 = vsyncpa %s3625, 1

</llo_original>
